<compile_context>
chip_gen: v7x
topology: tpu7x:2x2x1
jax: 0.10.0
libtpu: 0.0.40
codegen_flags: <defaults>
</compile_context>

<pallas_src>
import jax
import jax.numpy as jnp
from jax.experimental import pallas as pl
from jax.experimental.pallas import tpu as pltpu

_BN_EPS = 1e-5
_LANE = 128


# --------------------------- Pallas kernel (hot path) ---------------------------

def _full_spec(shape):
    zeros = (0,) * len(shape)
    return pl.BlockSpec(shape, lambda i: zeros)


def _make_double_conv_kernel(Wo, Mp, M_real):
    """Fused (conv3x3 -> BN -> ReLU) x 2 on a channels-first (C, Mp) slab.

    Pixel layout on the lane axis is row-major (n, h, w) with Wo columns per row;
    positions >= M_real are zero padding (excluded from BN statistics).
    """
    offsets = [(dy - 1) * Wo + (dx - 1) for dy in range(3) for dx in range(3)]
    inv_count = 1.0 / float(M_real)

    def conv_bn_relu(x, masks_f32, w_ref, g_ref, b_ref, valid):
        cout = w_ref.shape[1]
        acc = jnp.zeros((cout, Mp), jnp.float32)
        for t, off in enumerate(offsets):
            # Fused im2col tap: static lane roll + boundary mask (zero padding).
            shifted = x if off == 0 else pltpu.roll(x, (-off) % Mp, axis=1)
            cond = masks_f32[t:t + 1, :] > 0.5
            xs = jnp.where(cond, shifted, 0.0).astype(jnp.bfloat16)
            wt = w_ref[t].astype(jnp.bfloat16)                       # (Cout, Cin)
            acc = acc + jnp.dot(wt, xs, preferred_element_type=jnp.float32)
        # BatchNorm2d, training-mode batch statistics over the M_real true pixels
        # (biased variance, eps=1e-5).  Conv bias is omitted: BN cancels it.
        accv = jnp.where(valid, acc, 0.0)
        mean = jnp.sum(accv, axis=1, keepdims=True) * inv_count       # (Cout, 1)
        d = jnp.where(valid, acc - mean, 0.0)
        var = jnp.sum(d * d, axis=1, keepdims=True) * inv_count
        y = (acc - mean) * jax.lax.rsqrt(var + _BN_EPS)
        y = y * g_ref[...] + b_ref[...]
        y = jnp.maximum(y, 0.0)
        return jnp.where(valid, y, 0.0)          # keep lane padding at exact zero

    def kernel(x_ref, m_ref, w1_ref, g1_ref, b1_ref, w2_ref, g2_ref, b2_ref, o_ref):
        masks_f32 = m_ref[...]                    # (9, Mp)
        valid = masks_f32[4:5, :] > 0.5           # center tap == all real pixels
        y1 = conv_bn_relu(x_ref[...], masks_f32, w1_ref, g1_ref, b1_ref, valid)
        y2 = conv_bn_relu(y1, masks_f32, w2_ref, g2_ref, b2_ref, valid)
        o_ref[...] = y2

    return kernel


# --------------------------------- JAX glue ---------------------------------

def _tap_masks(N, Ho, Wo, Mp):
    """(9, Mp) float 0/1 masks: tap (dy,dx) valid where the shifted pixel is in-image."""
    h = jnp.arange(Ho)
    w = jnp.arange(Wo)
    rows = []
    for dy in range(3):
        for dx in range(3):
            mh = (h + (dy - 1) >= 0) & (h + (dy - 1) < Ho)
            mw = (w + (dx - 1) >= 0) & (w + (dx - 1) < Wo)
            m = (mh[:, None] & mw[None, :]).reshape(-1)               # (Ho*Wo,)
            rows.append(jnp.tile(m, (N,)))                            # (N*Ho*Wo,)
    masks = jnp.stack(rows, axis=0).astype(jnp.float32)
    return jnp.pad(masks, ((0, 0), (0, Mp - N * Ho * Wo)))


def down_block(x_nchw, p):
    """Down = MaxPool2d(2) then DoubleConv, fused into one Pallas kernel."""
    N, Cin, H, W = x_nchw.shape
    Ho, Wo = H // 2, W // 2
    # MaxPool2d(2) + layout change to channels-first / pixels-on-lanes (glue).
    pooled = x_nchw.reshape(N, Cin, Ho, 2, Wo, 2).max(axis=(3, 5))    # (N,Cin,Ho,Wo)
    M = N * Ho * Wo
    Mp = max(_LANE, ((M + _LANE - 1) // _LANE) * _LANE)               # lane-dense
    a = jnp.transpose(pooled, (1, 0, 2, 3)).reshape(Cin, M)
    a = jnp.pad(a, ((0, 0), (0, Mp - M)))
    masks = _tap_masks(N, Ho, Wo, Mp)

    Cout = p['w1'].shape[0]
    # PyTorch Conv2d weight (Cout, Cin, 3, 3) -> per-tap (9, Cout, Cin) matrices.
    w1 = jnp.transpose(p['w1'], (2, 3, 0, 1)).reshape(9, Cout, Cin)
    w2 = jnp.transpose(p['w2'], (2, 3, 0, 1)).reshape(9, Cout, Cout)
    g1 = p['g1'].reshape(Cout, 1)
    b1 = p['b1'].reshape(Cout, 1)
    g2 = p['g2'].reshape(Cout, 1)
    b2 = p['b2'].reshape(Cout, 1)

    kernel = _make_double_conv_kernel(Wo, Mp, M)
    y = pl.pallas_call(
        kernel,
        out_shape=jax.ShapeDtypeStruct((Cout, Mp), jnp.float32),
        grid=(1,),
        in_specs=[_full_spec(a.shape), _full_spec(masks.shape),
                  _full_spec(w1.shape), _full_spec(g1.shape), _full_spec(b1.shape),
                  _full_spec(w2.shape), _full_spec(g2.shape), _full_spec(b2.shape)],
        out_specs=_full_spec((Cout, Mp)),
        compiler_params=pltpu.CompilerParams(dimension_semantics=("arbitrary",)),
    )(a, masks, w1, g1, b1, w2, g2, b2)

    y = y[:, :M].reshape(Cout, N, Ho, Wo)
    return jnp.transpose(y, (1, 0, 2, 3))                             # back to NCHW


def encoder_forward(params, x_nchw):
    """Encoder.forward: collect input + every Down output, deepest feature first."""
    outs = [x_nchw]
    for p in params:
        outs.append(down_block(outs[-1], p))
    outs.reverse()
    return outs


# --------------------------- deterministic parameters ---------------------------

def build_encoder_params(key, topology):
    n = len(topology)
    params = []
    for idx in range(n):
        in_dim = topology[idx]
        out_dim = topology[idx + 1] if idx != n - 1 else topology[idx]
        key, *ks = jax.random.split(key, 7)
        params.append({
            # Conv2d(in, out, 3, padding=1) — bias folded away (BN cancels it).
            'w1': 0.1 * jax.random.normal(ks[0], (out_dim, in_dim, 3, 3), jnp.float32),
            'g1': 1.0 + 0.1 * jax.random.normal(ks[1], (out_dim,), jnp.float32),
            'b1': 0.1 * jax.random.normal(ks[2], (out_dim,), jnp.float32),
            # Conv2d(out, out, 3, padding=1)
            'w2': 0.1 * jax.random.normal(ks[3], (out_dim, out_dim, 3, 3), jnp.float32),
            'g2': 1.0 + 0.1 * jax.random.normal(ks[4], (out_dim,), jnp.float32),
            'b2': 0.1 * jax.random.normal(ks[5], (out_dim,), jnp.float32),
        })
    return params


if __name__ == "__main__":
    topology = [4, 8]                         # cfg.MODEL.TOPOLOGY surrogate
    key = jax.random.PRNGKey(0)
    kp, kx = jax.random.split(key)
    params = build_encoder_params(kp, topology)

    B = 2
    x = jax.random.normal(kx, (B, topology[0], 16, 16), jnp.float32)   # NCHW input

    outs = encoder_forward(params, x)
    outs = jax.block_until_ready(outs)

    # Encoder returns [down2_out, down1_out, input] (deepest first).
    assert outs[0].shape == (B, 8, 4, 4) and outs[0].dtype == jnp.float32
    assert outs[1].shape == (B, 8, 8, 8) and outs[1].dtype == jnp.float32
    assert outs[2].shape == (B, 4, 16, 16) and outs[2].dtype == jnp.float32
    print("KERNEL_OK")
</pallas_src>

<mosaic_0001>
module attributes {stable_mosaic.version = 11 : i64} {
  func.func @kernel(%arg0: i32, %arg1: memref<4x128xf32, #tpu.memory_space<vmem>>, %arg2: memref<9x128xf32, #tpu.memory_space<vmem>>, %arg3: memref<9x8x4xf32, #tpu.memory_space<vmem>>, %arg4: memref<8x1xf32, #tpu.memory_space<vmem>>, %arg5: memref<8x1xf32, #tpu.memory_space<vmem>>, %arg6: memref<9x8x8xf32, #tpu.memory_space<vmem>>, %arg7: memref<8x1xf32, #tpu.memory_space<vmem>>, %arg8: memref<8x1xf32, #tpu.memory_space<vmem>>, %arg9: memref<8x128xf32, #tpu.memory_space<vmem>>) attributes {dimension_semantics = [#tpu.dimension_semantics<arbitrary>], iteration_bounds = array<i64: 1>, scalar_prefetch = 0 : i64, scratch_operands = 0 : i64, tpu.core_type = #tpu.core_type<tc>, window_params = [{pipeline_mode = #tpu.pipeline_mode<synchronous>, transform_indices = @transform_0, window_bounds = array<i64: 4, 128>}, {pipeline_mode = #tpu.pipeline_mode<synchronous>, transform_indices = @transform_1, window_bounds = array<i64: 9, 128>}, {pipeline_mode = #tpu.pipeline_mode<synchronous>, transform_indices = @transform_2, window_bounds = array<i64: 9, 8, 4>}, {pipeline_mode = #tpu.pipeline_mode<synchronous>, transform_indices = @transform_3, window_bounds = array<i64: 8, 1>}, {pipeline_mode = #tpu.pipeline_mode<synchronous>, transform_indices = @transform_4, window_bounds = array<i64: 8, 1>}, {pipeline_mode = #tpu.pipeline_mode<synchronous>, transform_indices = @transform_5, window_bounds = array<i64: 9, 8, 8>}, {pipeline_mode = #tpu.pipeline_mode<synchronous>, transform_indices = @transform_6, window_bounds = array<i64: 8, 1>}, {pipeline_mode = #tpu.pipeline_mode<synchronous>, transform_indices = @transform_7, window_bounds = array<i64: 8, 1>}, {pipeline_mode = #tpu.pipeline_mode<synchronous>, transform_indices = @transform_8, window_bounds = array<i64: 8, 128>}]} {
    %c0 = arith.constant 0 : index
    %c0_0 = arith.constant 0 : index
    %0 = vector.load %arg2[%c0, %c0_0] : memref<9x128xf32, #tpu.memory_space<vmem>>, vector<9x128xf32>
    %1 = vector.extract_strided_slice %0 {offsets = [4, 0], sizes = [1, 128], strides = [1, 1]} : vector<9x128xf32> to vector<1x128xf32>
    %cst = arith.constant 5.000000e-01 : f32
    %2 = vector.broadcast %cst : f32 to vector<1x128xf32>
    %3 = arith.cmpf ogt, %1, %2 : vector<1x128xf32>
    %c0_1 = arith.constant 0 : index
    %c0_2 = arith.constant 0 : index
    %4 = vector.load %arg1[%c0_1, %c0_2] : memref<4x128xf32, #tpu.memory_space<vmem>>, vector<4x128xf32>
    %cst_3 = arith.constant 0.000000e+00 : f32
    %5 = vector.broadcast %cst_3 : f32 to vector<8x128xf32>
    %c9_i32 = arith.constant 9 : i32
    %6 = tpu.dynamic_rotate %4 by %c9_i32 dim 1 : vector<4x128xf32>, i32 -> vector<4x128xf32>
    %7 = vector.extract_strided_slice %0 {offsets = [0, 0], sizes = [1, 128], strides = [1, 1]} : vector<9x128xf32> to vector<1x128xf32>
    %cst_4 = arith.constant 5.000000e-01 : f32
    %8 = vector.broadcast %cst_4 : f32 to vector<1x128xf32>
    %9 = arith.cmpf ogt, %7, %8 : vector<1x128xf32>
    %cst_5 = arith.constant 0.000000e+00 : f32
    %10 = vector.shape_cast %9 : vector<1x128xi1> to vector<1x128xi1>
    %11 = vector.broadcast %10 : vector<1x128xi1> to vector<4x128xi1>
    %12 = vector.broadcast %cst_5 : f32 to vector<4x128xf32>
    %13 = arith.select %11, %6, %12 : vector<4x128xi1>, vector<4x128xf32>
    %14 = arith.truncf %13 : vector<4x128xf32> to vector<4x128xbf16>
    %c0_6 = arith.constant 0 : index
    %c0_7 = arith.constant 0 : index
    %c0_8 = arith.constant 0 : index
    %15 = vector.load %arg3[%c0_6, %c0_7, %c0_8] : memref<9x8x4xf32, #tpu.memory_space<vmem>>, vector<1x8x4xf32>
    %16 = vector.shape_cast %15 : vector<1x8x4xf32> to vector<8x4xf32>
    %17 = arith.truncf %16 : vector<8x4xf32> to vector<8x4xbf16>
    %cst_9 = arith.constant dense<0.000000e+00> : vector<8x128xf32>
    %18 = tpu.matmul %17, %14, %cst_9 {dimension_numbers = #tpu.dot_dimension_numbers<[1], [0], [0], [1], [0, 0, 1, 1], [], []>} : vector<8x4xbf16>, vector<4x128xbf16>, vector<8x128xf32> -> vector<8x128xf32>
    %19 = arith.addf %5, %18 : vector<8x128xf32>
    %c8_i32 = arith.constant 8 : i32
    %20 = tpu.dynamic_rotate %4 by %c8_i32 dim 1 : vector<4x128xf32>, i32 -> vector<4x128xf32>
    %21 = vector.extract_strided_slice %0 {offsets = [1, 0], sizes = [1, 128], strides = [1, 1]} : vector<9x128xf32> to vector<1x128xf32>
    %cst_10 = arith.constant 5.000000e-01 : f32
    %22 = vector.broadcast %cst_10 : f32 to vector<1x128xf32>
    %23 = arith.cmpf ogt, %21, %22 : vector<1x128xf32>
    %cst_11 = arith.constant 0.000000e+00 : f32
    %24 = vector.shape_cast %23 : vector<1x128xi1> to vector<1x128xi1>
    %25 = vector.broadcast %24 : vector<1x128xi1> to vector<4x128xi1>
    %26 = vector.broadcast %cst_11 : f32 to vector<4x128xf32>
    %27 = arith.select %25, %20, %26 : vector<4x128xi1>, vector<4x128xf32>
    %28 = arith.truncf %27 : vector<4x128xf32> to vector<4x128xbf16>
    %c1 = arith.constant 1 : index
    %c0_12 = arith.constant 0 : index
    %c0_13 = arith.constant 0 : index
    %29 = vector.load %arg3[%c1, %c0_12, %c0_13] : memref<9x8x4xf32, #tpu.memory_space<vmem>>, vector<1x8x4xf32>
    %30 = vector.shape_cast %29 : vector<1x8x4xf32> to vector<8x4xf32>
    %31 = arith.truncf %30 : vector<8x4xf32> to vector<8x4xbf16>
    %cst_14 = arith.constant dense<0.000000e+00> : vector<8x128xf32>
    %32 = tpu.matmul %31, %28, %cst_14 {dimension_numbers = #tpu.dot_dimension_numbers<[1], [0], [0], [1], [0, 0, 1, 1], [], []>} : vector<8x4xbf16>, vector<4x128xbf16>, vector<8x128xf32> -> vector<8x128xf32>
    %33 = arith.addf %19, %32 : vector<8x128xf32>
    %c7_i32 = arith.constant 7 : i32
    %34 = tpu.dynamic_rotate %4 by %c7_i32 dim 1 : vector<4x128xf32>, i32 -> vector<4x128xf32>
    %35 = vector.extract_strided_slice %0 {offsets = [2, 0], sizes = [1, 128], strides = [1, 1]} : vector<9x128xf32> to vector<1x128xf32>
    %cst_15 = arith.constant 5.000000e-01 : f32
    %36 = vector.broadcast %cst_15 : f32 to vector<1x128xf32>
    %37 = arith.cmpf ogt, %35, %36 : vector<1x128xf32>
    %cst_16 = arith.constant 0.000000e+00 : f32
    %38 = vector.shape_cast %37 : vector<1x128xi1> to vector<1x128xi1>
    %39 = vector.broadcast %38 : vector<1x128xi1> to vector<4x128xi1>
    %40 = vector.broadcast %cst_16 : f32 to vector<4x128xf32>
    %41 = arith.select %39, %34, %40 : vector<4x128xi1>, vector<4x128xf32>
    %42 = arith.truncf %41 : vector<4x128xf32> to vector<4x128xbf16>
    %c2 = arith.constant 2 : index
    %c0_17 = arith.constant 0 : index
    %c0_18 = arith.constant 0 : index
    %43 = vector.load %arg3[%c2, %c0_17, %c0_18] : memref<9x8x4xf32, #tpu.memory_space<vmem>>, vector<1x8x4xf32>
    %44 = vector.shape_cast %43 : vector<1x8x4xf32> to vector<8x4xf32>
    %45 = arith.truncf %44 : vector<8x4xf32> to vector<8x4xbf16>
    %cst_19 = arith.constant dense<0.000000e+00> : vector<8x128xf32>
    %46 = tpu.matmul %45, %42, %cst_19 {dimension_numbers = #tpu.dot_dimension_numbers<[1], [0], [0], [1], [0, 0, 1, 1], [], []>} : vector<8x4xbf16>, vector<4x128xbf16>, vector<8x128xf32> -> vector<8x128xf32>
    %47 = arith.addf %33, %46 : vector<8x128xf32>
    %c1_i32 = arith.constant 1 : i32
    %48 = tpu.dynamic_rotate %4 by %c1_i32 dim 1 : vector<4x128xf32>, i32 -> vector<4x128xf32>
    %49 = vector.extract_strided_slice %0 {offsets = [3, 0], sizes = [1, 128], strides = [1, 1]} : vector<9x128xf32> to vector<1x128xf32>
    %cst_20 = arith.constant 5.000000e-01 : f32
    %50 = vector.broadcast %cst_20 : f32 to vector<1x128xf32>
    %51 = arith.cmpf ogt, %49, %50 : vector<1x128xf32>
    %cst_21 = arith.constant 0.000000e+00 : f32
    %52 = vector.shape_cast %51 : vector<1x128xi1> to vector<1x128xi1>
    %53 = vector.broadcast %52 : vector<1x128xi1> to vector<4x128xi1>
    %54 = vector.broadcast %cst_21 : f32 to vector<4x128xf32>
    %55 = arith.select %53, %48, %54 : vector<4x128xi1>, vector<4x128xf32>
    %56 = arith.truncf %55 : vector<4x128xf32> to vector<4x128xbf16>
    %c3 = arith.constant 3 : index
    %c0_22 = arith.constant 0 : index
    %c0_23 = arith.constant 0 : index
    %57 = vector.load %arg3[%c3, %c0_22, %c0_23] : memref<9x8x4xf32, #tpu.memory_space<vmem>>, vector<1x8x4xf32>
    %58 = vector.shape_cast %57 : vector<1x8x4xf32> to vector<8x4xf32>
    %59 = arith.truncf %58 : vector<8x4xf32> to vector<8x4xbf16>
    %cst_24 = arith.constant dense<0.000000e+00> : vector<8x128xf32>
    %60 = tpu.matmul %59, %56, %cst_24 {dimension_numbers = #tpu.dot_dimension_numbers<[1], [0], [0], [1], [0, 0, 1, 1], [], []>} : vector<8x4xbf16>, vector<4x128xbf16>, vector<8x128xf32> -> vector<8x128xf32>
    %61 = arith.addf %47, %60 : vector<8x128xf32>
    %62 = vector.extract_strided_slice %0 {offsets = [4, 0], sizes = [1, 128], strides = [1, 1]} : vector<9x128xf32> to vector<1x128xf32>
    %cst_25 = arith.constant 5.000000e-01 : f32
    %63 = vector.broadcast %cst_25 : f32 to vector<1x128xf32>
    %64 = arith.cmpf ogt, %62, %63 : vector<1x128xf32>
    %cst_26 = arith.constant 0.000000e+00 : f32
    %65 = vector.shape_cast %64 : vector<1x128xi1> to vector<1x128xi1>
    %66 = vector.broadcast %65 : vector<1x128xi1> to vector<4x128xi1>
    %67 = vector.broadcast %cst_26 : f32 to vector<4x128xf32>
    %68 = arith.select %66, %4, %67 : vector<4x128xi1>, vector<4x128xf32>
    %69 = arith.truncf %68 : vector<4x128xf32> to vector<4x128xbf16>
    %c4 = arith.constant 4 : index
    %c0_27 = arith.constant 0 : index
    %c0_28 = arith.constant 0 : index
    %70 = vector.load %arg3[%c4, %c0_27, %c0_28] : memref<9x8x4xf32, #tpu.memory_space<vmem>>, vector<1x8x4xf32>
    %71 = vector.shape_cast %70 : vector<1x8x4xf32> to vector<8x4xf32>
    %72 = arith.truncf %71 : vector<8x4xf32> to vector<8x4xbf16>
    %cst_29 = arith.constant dense<0.000000e+00> : vector<8x128xf32>
    %73 = tpu.matmul %72, %69, %cst_29 {dimension_numbers = #tpu.dot_dimension_numbers<[1], [0], [0], [1], [0, 0, 1, 1], [], []>} : vector<8x4xbf16>, vector<4x128xbf16>, vector<8x128xf32> -> vector<8x128xf32>
    %74 = arith.addf %61, %73 : vector<8x128xf32>
    %c127_i32 = arith.constant 127 : i32
    %75 = tpu.dynamic_rotate %4 by %c127_i32 dim 1 : vector<4x128xf32>, i32 -> vector<4x128xf32>
    %76 = vector.extract_strided_slice %0 {offsets = [5, 0], sizes = [1, 128], strides = [1, 1]} : vector<9x128xf32> to vector<1x128xf32>
    %cst_30 = arith.constant 5.000000e-01 : f32
    %77 = vector.broadcast %cst_30 : f32 to vector<1x128xf32>
    %78 = arith.cmpf ogt, %76, %77 : vector<1x128xf32>
    %cst_31 = arith.constant 0.000000e+00 : f32
    %79 = vector.shape_cast %78 : vector<1x128xi1> to vector<1x128xi1>
    %80 = vector.broadcast %79 : vector<1x128xi1> to vector<4x128xi1>
    %81 = vector.broadcast %cst_31 : f32 to vector<4x128xf32>
    %82 = arith.select %80, %75, %81 : vector<4x128xi1>, vector<4x128xf32>
    %83 = arith.truncf %82 : vector<4x128xf32> to vector<4x128xbf16>
    %c5 = arith.constant 5 : index
    %c0_32 = arith.constant 0 : index
    %c0_33 = arith.constant 0 : index
    %84 = vector.load %arg3[%c5, %c0_32, %c0_33] : memref<9x8x4xf32, #tpu.memory_space<vmem>>, vector<1x8x4xf32>
    %85 = vector.shape_cast %84 : vector<1x8x4xf32> to vector<8x4xf32>
    %86 = arith.truncf %85 : vector<8x4xf32> to vector<8x4xbf16>
    %cst_34 = arith.constant dense<0.000000e+00> : vector<8x128xf32>
    %87 = tpu.matmul %86, %83, %cst_34 {dimension_numbers = #tpu.dot_dimension_numbers<[1], [0], [0], [1], [0, 0, 1, 1], [], []>} : vector<8x4xbf16>, vector<4x128xbf16>, vector<8x128xf32> -> vector<8x128xf32>
    %88 = arith.addf %74, %87 : vector<8x128xf32>
    %c121_i32 = arith.constant 121 : i32
    %89 = tpu.dynamic_rotate %4 by %c121_i32 dim 1 : vector<4x128xf32>, i32 -> vector<4x128xf32>
    %90 = vector.extract_strided_slice %0 {offsets = [6, 0], sizes = [1, 128], strides = [1, 1]} : vector<9x128xf32> to vector<1x128xf32>
    %cst_35 = arith.constant 5.000000e-01 : f32
    %91 = vector.broadcast %cst_35 : f32 to vector<1x128xf32>
    %92 = arith.cmpf ogt, %90, %91 : vector<1x128xf32>
    %cst_36 = arith.constant 0.000000e+00 : f32
    %93 = vector.shape_cast %92 : vector<1x128xi1> to vector<1x128xi1>
    %94 = vector.broadcast %93 : vector<1x128xi1> to vector<4x128xi1>
    %95 = vector.broadcast %cst_36 : f32 to vector<4x128xf32>
    %96 = arith.select %94, %89, %95 : vector<4x128xi1>, vector<4x128xf32>
    %97 = arith.truncf %96 : vector<4x128xf32> to vector<4x128xbf16>
    %c6 = arith.constant 6 : index
    %c0_37 = arith.constant 0 : index
    %c0_38 = arith.constant 0 : index
    %98 = vector.load %arg3[%c6, %c0_37, %c0_38] : memref<9x8x4xf32, #tpu.memory_space<vmem>>, vector<1x8x4xf32>
    %99 = vector.shape_cast %98 : vector<1x8x4xf32> to vector<8x4xf32>
    %100 = arith.truncf %99 : vector<8x4xf32> to vector<8x4xbf16>
    %cst_39 = arith.constant dense<0.000000e+00> : vector<8x128xf32>
    %101 = tpu.matmul %100, %97, %cst_39 {dimension_numbers = #tpu.dot_dimension_numbers<[1], [0], [0], [1], [0, 0, 1, 1], [], []>} : vector<8x4xbf16>, vector<4x128xbf16>, vector<8x128xf32> -> vector<8x128xf32>
    %102 = arith.addf %88, %101 : vector<8x128xf32>
    %c120_i32 = arith.constant 120 : i32
    %103 = tpu.dynamic_rotate %4 by %c120_i32 dim 1 : vector<4x128xf32>, i32 -> vector<4x128xf32>
    %104 = vector.extract_strided_slice %0 {offsets = [7, 0], sizes = [1, 128], strides = [1, 1]} : vector<9x128xf32> to vector<1x128xf32>
    %cst_40 = arith.constant 5.000000e-01 : f32
    %105 = vector.broadcast %cst_40 : f32 to vector<1x128xf32>
    %106 = arith.cmpf ogt, %104, %105 : vector<1x128xf32>
    %cst_41 = arith.constant 0.000000e+00 : f32
    %107 = vector.shape_cast %106 : vector<1x128xi1> to vector<1x128xi1>
    %108 = vector.broadcast %107 : vector<1x128xi1> to vector<4x128xi1>
    %109 = vector.broadcast %cst_41 : f32 to vector<4x128xf32>
    %110 = arith.select %108, %103, %109 : vector<4x128xi1>, vector<4x128xf32>
    %111 = arith.truncf %110 : vector<4x128xf32> to vector<4x128xbf16>
    %c7 = arith.constant 7 : index
    %c0_42 = arith.constant 0 : index
    %c0_43 = arith.constant 0 : index
    %112 = vector.load %arg3[%c7, %c0_42, %c0_43] : memref<9x8x4xf32, #tpu.memory_space<vmem>>, vector<1x8x4xf32>
    %113 = vector.shape_cast %112 : vector<1x8x4xf32> to vector<8x4xf32>
    %114 = arith.truncf %113 : vector<8x4xf32> to vector<8x4xbf16>
    %cst_44 = arith.constant dense<0.000000e+00> : vector<8x128xf32>
    %115 = tpu.matmul %114, %111, %cst_44 {dimension_numbers = #tpu.dot_dimension_numbers<[1], [0], [0], [1], [0, 0, 1, 1], [], []>} : vector<8x4xbf16>, vector<4x128xbf16>, vector<8x128xf32> -> vector<8x128xf32>
    %116 = arith.addf %102, %115 : vector<8x128xf32>
    %c119_i32 = arith.constant 119 : i32
    %117 = tpu.dynamic_rotate %4 by %c119_i32 dim 1 : vector<4x128xf32>, i32 -> vector<4x128xf32>
    %118 = vector.extract_strided_slice %0 {offsets = [8, 0], sizes = [1, 128], strides = [1, 1]} : vector<9x128xf32> to vector<1x128xf32>
    %cst_45 = arith.constant 5.000000e-01 : f32
    %119 = vector.broadcast %cst_45 : f32 to vector<1x128xf32>
    %120 = arith.cmpf ogt, %118, %119 : vector<1x128xf32>
    %cst_46 = arith.constant 0.000000e+00 : f32
    %121 = vector.shape_cast %120 : vector<1x128xi1> to vector<1x128xi1>
    %122 = vector.broadcast %121 : vector<1x128xi1> to vector<4x128xi1>
    %123 = vector.broadcast %cst_46 : f32 to vector<4x128xf32>
    %124 = arith.select %122, %117, %123 : vector<4x128xi1>, vector<4x128xf32>
    %125 = arith.truncf %124 : vector<4x128xf32> to vector<4x128xbf16>
    %c8 = arith.constant 8 : index
    %c0_47 = arith.constant 0 : index
    %c0_48 = arith.constant 0 : index
    %126 = vector.load %arg3[%c8, %c0_47, %c0_48] : memref<9x8x4xf32, #tpu.memory_space<vmem>>, vector<1x8x4xf32>
    %127 = vector.shape_cast %126 : vector<1x8x4xf32> to vector<8x4xf32>
    %128 = arith.truncf %127 : vector<8x4xf32> to vector<8x4xbf16>
    %cst_49 = arith.constant dense<0.000000e+00> : vector<8x128xf32>
    %129 = tpu.matmul %128, %125, %cst_49 {dimension_numbers = #tpu.dot_dimension_numbers<[1], [0], [0], [1], [0, 0, 1, 1], [], []>} : vector<8x4xbf16>, vector<4x128xbf16>, vector<8x128xf32> -> vector<8x128xf32>
    %130 = arith.addf %116, %129 : vector<8x128xf32>
    %cst_50 = arith.constant 0.000000e+00 : f32
    %131 = vector.shape_cast %3 : vector<1x128xi1> to vector<1x128xi1>
    %132 = vector.broadcast %131 : vector<1x128xi1> to vector<8x128xi1>
    %133 = vector.broadcast %cst_50 : f32 to vector<8x128xf32>
    %134 = arith.select %132, %130, %133 : vector<8x128xi1>, vector<8x128xf32>
    %cst_51 = arith.constant dense<0.000000e+00> : vector<8xf32>
    %135 = vector.multi_reduction <add>, %134, %cst_51 [1] : vector<8x128xf32> to vector<8xf32>
    %136 = vector.shape_cast %135 : vector<8xf32> to vector<8x1xf32>
    %cst_52 = arith.constant 7.812500e-03 : f32
    %137 = vector.broadcast %cst_52 : f32 to vector<8x1xf32>
    %138 = arith.mulf %136, %137 : vector<8x1xf32>
    %139 = vector.broadcast %138 : vector<8x1xf32> to vector<8x128xf32>
    %140 = arith.subf %130, %139 : vector<8x128xf32>
    %cst_53 = arith.constant 0.000000e+00 : f32
    %141 = vector.shape_cast %3 : vector<1x128xi1> to vector<1x128xi1>
    %142 = vector.broadcast %141 : vector<1x128xi1> to vector<8x128xi1>
    %143 = vector.broadcast %cst_53 : f32 to vector<8x128xf32>
    %144 = arith.select %142, %140, %143 : vector<8x128xi1>, vector<8x128xf32>
    %145 = arith.mulf %144, %144 : vector<8x128xf32>
    %cst_54 = arith.constant dense<0.000000e+00> : vector<8xf32>
    %146 = vector.multi_reduction <add>, %145, %cst_54 [1] : vector<8x128xf32> to vector<8xf32>
    %147 = vector.shape_cast %146 : vector<8xf32> to vector<8x1xf32>
    %cst_55 = arith.constant 7.812500e-03 : f32
    %148 = vector.broadcast %cst_55 : f32 to vector<8x1xf32>
    %149 = arith.mulf %147, %148 : vector<8x1xf32>
    %150 = vector.broadcast %138 : vector<8x1xf32> to vector<8x128xf32>
    %151 = arith.subf %130, %150 : vector<8x128xf32>
    %cst_56 = arith.constant 9.99999974E-6 : f32
    %152 = vector.broadcast %cst_56 : f32 to vector<8x1xf32>
    %153 = arith.addf %149, %152 : vector<8x1xf32>
    %154 = math.rsqrt %153 : vector<8x1xf32>
    %155 = vector.broadcast %154 : vector<8x1xf32> to vector<8x128xf32>
    %156 = arith.mulf %151, %155 : vector<8x128xf32>
    %c0_57 = arith.constant 0 : index
    %c0_58 = arith.constant 0 : index
    %157 = vector.load %arg4[%c0_57, %c0_58] : memref<8x1xf32, #tpu.memory_space<vmem>>, vector<8x1xf32>
    %158 = vector.broadcast %157 : vector<8x1xf32> to vector<8x128xf32>
    %159 = arith.mulf %156, %158 : vector<8x128xf32>
    %c0_59 = arith.constant 0 : index
    %c0_60 = arith.constant 0 : index
    %160 = vector.load %arg5[%c0_59, %c0_60] : memref<8x1xf32, #tpu.memory_space<vmem>>, vector<8x1xf32>
    %161 = vector.broadcast %160 : vector<8x1xf32> to vector<8x128xf32>
    %162 = arith.addf %159, %161 : vector<8x128xf32>
    %cst_61 = arith.constant 0.000000e+00 : f32
    %163 = vector.broadcast %cst_61 : f32 to vector<8x128xf32>
    %164 = arith.maximumf %162, %163 : vector<8x128xf32>
    %cst_62 = arith.constant 0.000000e+00 : f32
    %165 = vector.shape_cast %3 : vector<1x128xi1> to vector<1x128xi1>
    %166 = vector.broadcast %165 : vector<1x128xi1> to vector<8x128xi1>
    %167 = vector.broadcast %cst_62 : f32 to vector<8x128xf32>
    %168 = arith.select %166, %164, %167 : vector<8x128xi1>, vector<8x128xf32>
    %cst_63 = arith.constant 0.000000e+00 : f32
    %169 = vector.broadcast %cst_63 : f32 to vector<8x128xf32>
    %c9_i32_64 = arith.constant 9 : i32
    %170 = tpu.dynamic_rotate %168 by %c9_i32_64 dim 1 : vector<8x128xf32>, i32 -> vector<8x128xf32>
    %171 = vector.extract_strided_slice %0 {offsets = [0, 0], sizes = [1, 128], strides = [1, 1]} : vector<9x128xf32> to vector<1x128xf32>
    %cst_65 = arith.constant 5.000000e-01 : f32
    %172 = vector.broadcast %cst_65 : f32 to vector<1x128xf32>
    %173 = arith.cmpf ogt, %171, %172 : vector<1x128xf32>
    %cst_66 = arith.constant 0.000000e+00 : f32
    %174 = vector.shape_cast %173 : vector<1x128xi1> to vector<1x128xi1>
    %175 = vector.broadcast %174 : vector<1x128xi1> to vector<8x128xi1>
    %176 = vector.broadcast %cst_66 : f32 to vector<8x128xf32>
    %177 = arith.select %175, %170, %176 : vector<8x128xi1>, vector<8x128xf32>
    %178 = arith.truncf %177 : vector<8x128xf32> to vector<8x128xbf16>
    %c0_67 = arith.constant 0 : index
    %c0_68 = arith.constant 0 : index
    %c0_69 = arith.constant 0 : index
    %179 = vector.load %arg6[%c0_67, %c0_68, %c0_69] : memref<9x8x8xf32, #tpu.memory_space<vmem>>, vector<1x8x8xf32>
    %180 = vector.shape_cast %179 : vector<1x8x8xf32> to vector<8x8xf32>
    %181 = arith.truncf %180 : vector<8x8xf32> to vector<8x8xbf16>
    %cst_70 = arith.constant dense<0.000000e+00> : vector<8x128xf32>
    %182 = tpu.matmul %181, %178, %cst_70 {dimension_numbers = #tpu.dot_dimension_numbers<[1], [0], [0], [1], [0, 0, 1, 1], [], []>} : vector<8x8xbf16>, vector<8x128xbf16>, vector<8x128xf32> -> vector<8x128xf32>
    %183 = arith.addf %169, %182 : vector<8x128xf32>
    %c8_i32_71 = arith.constant 8 : i32
    %184 = tpu.dynamic_rotate %168 by %c8_i32_71 dim 1 : vector<8x128xf32>, i32 -> vector<8x128xf32>
    %185 = vector.extract_strided_slice %0 {offsets = [1, 0], sizes = [1, 128], strides = [1, 1]} : vector<9x128xf32> to vector<1x128xf32>
    %cst_72 = arith.constant 5.000000e-01 : f32
    %186 = vector.broadcast %cst_72 : f32 to vector<1x128xf32>
    %187 = arith.cmpf ogt, %185, %186 : vector<1x128xf32>
    %cst_73 = arith.constant 0.000000e+00 : f32
    %188 = vector.shape_cast %187 : vector<1x128xi1> to vector<1x128xi1>
    %189 = vector.broadcast %188 : vector<1x128xi1> to vector<8x128xi1>
    %190 = vector.broadcast %cst_73 : f32 to vector<8x128xf32>
    %191 = arith.select %189, %184, %190 : vector<8x128xi1>, vector<8x128xf32>
    %192 = arith.truncf %191 : vector<8x128xf32> to vector<8x128xbf16>
    %c1_74 = arith.constant 1 : index
    %c0_75 = arith.constant 0 : index
    %c0_76 = arith.constant 0 : index
    %193 = vector.load %arg6[%c1_74, %c0_75, %c0_76] : memref<9x8x8xf32, #tpu.memory_space<vmem>>, vector<1x8x8xf32>
    %194 = vector.shape_cast %193 : vector<1x8x8xf32> to vector<8x8xf32>
    %195 = arith.truncf %194 : vector<8x8xf32> to vector<8x8xbf16>
    %cst_77 = arith.constant dense<0.000000e+00> : vector<8x128xf32>
    %196 = tpu.matmul %195, %192, %cst_77 {dimension_numbers = #tpu.dot_dimension_numbers<[1], [0], [0], [1], [0, 0, 1, 1], [], []>} : vector<8x8xbf16>, vector<8x128xbf16>, vector<8x128xf32> -> vector<8x128xf32>
    %197 = arith.addf %183, %196 : vector<8x128xf32>
    %c7_i32_78 = arith.constant 7 : i32
    %198 = tpu.dynamic_rotate %168 by %c7_i32_78 dim 1 : vector<8x128xf32>, i32 -> vector<8x128xf32>
    %199 = vector.extract_strided_slice %0 {offsets = [2, 0], sizes = [1, 128], strides = [1, 1]} : vector<9x128xf32> to vector<1x128xf32>
    %cst_79 = arith.constant 5.000000e-01 : f32
    %200 = vector.broadcast %cst_79 : f32 to vector<1x128xf32>
    %201 = arith.cmpf ogt, %199, %200 : vector<1x128xf32>
    %cst_80 = arith.constant 0.000000e+00 : f32
    %202 = vector.shape_cast %201 : vector<1x128xi1> to vector<1x128xi1>
    %203 = vector.broadcast %202 : vector<1x128xi1> to vector<8x128xi1>
    %204 = vector.broadcast %cst_80 : f32 to vector<8x128xf32>
    %205 = arith.select %203, %198, %204 : vector<8x128xi1>, vector<8x128xf32>
    %206 = arith.truncf %205 : vector<8x128xf32> to vector<8x128xbf16>
    %c2_81 = arith.constant 2 : index
    %c0_82 = arith.constant 0 : index
    %c0_83 = arith.constant 0 : index
    %207 = vector.load %arg6[%c2_81, %c0_82, %c0_83] : memref<9x8x8xf32, #tpu.memory_space<vmem>>, vector<1x8x8xf32>
    %208 = vector.shape_cast %207 : vector<1x8x8xf32> to vector<8x8xf32>
    %209 = arith.truncf %208 : vector<8x8xf32> to vector<8x8xbf16>
    %cst_84 = arith.constant dense<0.000000e+00> : vector<8x128xf32>
    %210 = tpu.matmul %209, %206, %cst_84 {dimension_numbers = #tpu.dot_dimension_numbers<[1], [0], [0], [1], [0, 0, 1, 1], [], []>} : vector<8x8xbf16>, vector<8x128xbf16>, vector<8x128xf32> -> vector<8x128xf32>
    %211 = arith.addf %197, %210 : vector<8x128xf32>
    %c1_i32_85 = arith.constant 1 : i32
    %212 = tpu.dynamic_rotate %168 by %c1_i32_85 dim 1 : vector<8x128xf32>, i32 -> vector<8x128xf32>
    %213 = vector.extract_strided_slice %0 {offsets = [3, 0], sizes = [1, 128], strides = [1, 1]} : vector<9x128xf32> to vector<1x128xf32>
    %cst_86 = arith.constant 5.000000e-01 : f32
    %214 = vector.broadcast %cst_86 : f32 to vector<1x128xf32>
    %215 = arith.cmpf ogt, %213, %214 : vector<1x128xf32>
    %cst_87 = arith.constant 0.000000e+00 : f32
    %216 = vector.shape_cast %215 : vector<1x128xi1> to vector<1x128xi1>
    %217 = vector.broadcast %216 : vector<1x128xi1> to vector<8x128xi1>
    %218 = vector.broadcast %cst_87 : f32 to vector<8x128xf32>
    %219 = arith.select %217, %212, %218 : vector<8x128xi1>, vector<8x128xf32>
    %220 = arith.truncf %219 : vector<8x128xf32> to vector<8x128xbf16>
    %c3_88 = arith.constant 3 : index
    %c0_89 = arith.constant 0 : index
    %c0_90 = arith.constant 0 : index
    %221 = vector.load %arg6[%c3_88, %c0_89, %c0_90] : memref<9x8x8xf32, #tpu.memory_space<vmem>>, vector<1x8x8xf32>
    %222 = vector.shape_cast %221 : vector<1x8x8xf32> to vector<8x8xf32>
    %223 = arith.truncf %222 : vector<8x8xf32> to vector<8x8xbf16>
    %cst_91 = arith.constant dense<0.000000e+00> : vector<8x128xf32>
    %224 = tpu.matmul %223, %220, %cst_91 {dimension_numbers = #tpu.dot_dimension_numbers<[1], [0], [0], [1], [0, 0, 1, 1], [], []>} : vector<8x8xbf16>, vector<8x128xbf16>, vector<8x128xf32> -> vector<8x128xf32>
    %225 = arith.addf %211, %224 : vector<8x128xf32>
    %226 = vector.extract_strided_slice %0 {offsets = [4, 0], sizes = [1, 128], strides = [1, 1]} : vector<9x128xf32> to vector<1x128xf32>
    %cst_92 = arith.constant 5.000000e-01 : f32
    %227 = vector.broadcast %cst_92 : f32 to vector<1x128xf32>
    %228 = arith.cmpf ogt, %226, %227 : vector<1x128xf32>
    %cst_93 = arith.constant 0.000000e+00 : f32
    %229 = vector.shape_cast %228 : vector<1x128xi1> to vector<1x128xi1>
    %230 = vector.broadcast %229 : vector<1x128xi1> to vector<8x128xi1>
    %231 = vector.broadcast %cst_93 : f32 to vector<8x128xf32>
    %232 = arith.select %230, %168, %231 : vector<8x128xi1>, vector<8x128xf32>
    %233 = arith.truncf %232 : vector<8x128xf32> to vector<8x128xbf16>
    %c4_94 = arith.constant 4 : index
    %c0_95 = arith.constant 0 : index
    %c0_96 = arith.constant 0 : index
    %234 = vector.load %arg6[%c4_94, %c0_95, %c0_96] : memref<9x8x8xf32, #tpu.memory_space<vmem>>, vector<1x8x8xf32>
    %235 = vector.shape_cast %234 : vector<1x8x8xf32> to vector<8x8xf32>
    %236 = arith.truncf %235 : vector<8x8xf32> to vector<8x8xbf16>
    %cst_97 = arith.constant dense<0.000000e+00> : vector<8x128xf32>
    %237 = tpu.matmul %236, %233, %cst_97 {dimension_numbers = #tpu.dot_dimension_numbers<[1], [0], [0], [1], [0, 0, 1, 1], [], []>} : vector<8x8xbf16>, vector<8x128xbf16>, vector<8x128xf32> -> vector<8x128xf32>
    %238 = arith.addf %225, %237 : vector<8x128xf32>
    %c127_i32_98 = arith.constant 127 : i32
    %239 = tpu.dynamic_rotate %168 by %c127_i32_98 dim 1 : vector<8x128xf32>, i32 -> vector<8x128xf32>
    %240 = vector.extract_strided_slice %0 {offsets = [5, 0], sizes = [1, 128], strides = [1, 1]} : vector<9x128xf32> to vector<1x128xf32>
    %cst_99 = arith.constant 5.000000e-01 : f32
    %241 = vector.broadcast %cst_99 : f32 to vector<1x128xf32>
    %242 = arith.cmpf ogt, %240, %241 : vector<1x128xf32>
    %cst_100 = arith.constant 0.000000e+00 : f32
    %243 = vector.shape_cast %242 : vector<1x128xi1> to vector<1x128xi1>
    %244 = vector.broadcast %243 : vector<1x128xi1> to vector<8x128xi1>
    %245 = vector.broadcast %cst_100 : f32 to vector<8x128xf32>
    %246 = arith.select %244, %239, %245 : vector<8x128xi1>, vector<8x128xf32>
    %247 = arith.truncf %246 : vector<8x128xf32> to vector<8x128xbf16>
    %c5_101 = arith.constant 5 : index
    %c0_102 = arith.constant 0 : index
    %c0_103 = arith.constant 0 : index
    %248 = vector.load %arg6[%c5_101, %c0_102, %c0_103] : memref<9x8x8xf32, #tpu.memory_space<vmem>>, vector<1x8x8xf32>
    %249 = vector.shape_cast %248 : vector<1x8x8xf32> to vector<8x8xf32>
    %250 = arith.truncf %249 : vector<8x8xf32> to vector<8x8xbf16>
    %cst_104 = arith.constant dense<0.000000e+00> : vector<8x128xf32>
    %251 = tpu.matmul %250, %247, %cst_104 {dimension_numbers = #tpu.dot_dimension_numbers<[1], [0], [0], [1], [0, 0, 1, 1], [], []>} : vector<8x8xbf16>, vector<8x128xbf16>, vector<8x128xf32> -> vector<8x128xf32>
    %252 = arith.addf %238, %251 : vector<8x128xf32>
    %c121_i32_105 = arith.constant 121 : i32
    %253 = tpu.dynamic_rotate %168 by %c121_i32_105 dim 1 : vector<8x128xf32>, i32 -> vector<8x128xf32>
    %254 = vector.extract_strided_slice %0 {offsets = [6, 0], sizes = [1, 128], strides = [1, 1]} : vector<9x128xf32> to vector<1x128xf32>
    %cst_106 = arith.constant 5.000000e-01 : f32
    %255 = vector.broadcast %cst_106 : f32 to vector<1x128xf32>
    %256 = arith.cmpf ogt, %254, %255 : vector<1x128xf32>
    %cst_107 = arith.constant 0.000000e+00 : f32
    %257 = vector.shape_cast %256 : vector<1x128xi1> to vector<1x128xi1>
    %258 = vector.broadcast %257 : vector<1x128xi1> to vector<8x128xi1>
    %259 = vector.broadcast %cst_107 : f32 to vector<8x128xf32>
    %260 = arith.select %258, %253, %259 : vector<8x128xi1>, vector<8x128xf32>
    %261 = arith.truncf %260 : vector<8x128xf32> to vector<8x128xbf16>
    %c6_108 = arith.constant 6 : index
    %c0_109 = arith.constant 0 : index
    %c0_110 = arith.constant 0 : index
    %262 = vector.load %arg6[%c6_108, %c0_109, %c0_110] : memref<9x8x8xf32, #tpu.memory_space<vmem>>, vector<1x8x8xf32>
    %263 = vector.shape_cast %262 : vector<1x8x8xf32> to vector<8x8xf32>
    %264 = arith.truncf %263 : vector<8x8xf32> to vector<8x8xbf16>
    %cst_111 = arith.constant dense<0.000000e+00> : vector<8x128xf32>
    %265 = tpu.matmul %264, %261, %cst_111 {dimension_numbers = #tpu.dot_dimension_numbers<[1], [0], [0], [1], [0, 0, 1, 1], [], []>} : vector<8x8xbf16>, vector<8x128xbf16>, vector<8x128xf32> -> vector<8x128xf32>
    %266 = arith.addf %252, %265 : vector<8x128xf32>
    %c120_i32_112 = arith.constant 120 : i32
    %267 = tpu.dynamic_rotate %168 by %c120_i32_112 dim 1 : vector<8x128xf32>, i32 -> vector<8x128xf32>
    %268 = vector.extract_strided_slice %0 {offsets = [7, 0], sizes = [1, 128], strides = [1, 1]} : vector<9x128xf32> to vector<1x128xf32>
    %cst_113 = arith.constant 5.000000e-01 : f32
    %269 = vector.broadcast %cst_113 : f32 to vector<1x128xf32>
    %270 = arith.cmpf ogt, %268, %269 : vector<1x128xf32>
    %cst_114 = arith.constant 0.000000e+00 : f32
    %271 = vector.shape_cast %270 : vector<1x128xi1> to vector<1x128xi1>
    %272 = vector.broadcast %271 : vector<1x128xi1> to vector<8x128xi1>
    %273 = vector.broadcast %cst_114 : f32 to vector<8x128xf32>
    %274 = arith.select %272, %267, %273 : vector<8x128xi1>, vector<8x128xf32>
    %275 = arith.truncf %274 : vector<8x128xf32> to vector<8x128xbf16>
    %c7_115 = arith.constant 7 : index
    %c0_116 = arith.constant 0 : index
    %c0_117 = arith.constant 0 : index
    %276 = vector.load %arg6[%c7_115, %c0_116, %c0_117] : memref<9x8x8xf32, #tpu.memory_space<vmem>>, vector<1x8x8xf32>
    %277 = vector.shape_cast %276 : vector<1x8x8xf32> to vector<8x8xf32>
    %278 = arith.truncf %277 : vector<8x8xf32> to vector<8x8xbf16>
    %cst_118 = arith.constant dense<0.000000e+00> : vector<8x128xf32>
    %279 = tpu.matmul %278, %275, %cst_118 {dimension_numbers = #tpu.dot_dimension_numbers<[1], [0], [0], [1], [0, 0, 1, 1], [], []>} : vector<8x8xbf16>, vector<8x128xbf16>, vector<8x128xf32> -> vector<8x128xf32>
    %280 = arith.addf %266, %279 : vector<8x128xf32>
    %c119_i32_119 = arith.constant 119 : i32
    %281 = tpu.dynamic_rotate %168 by %c119_i32_119 dim 1 : vector<8x128xf32>, i32 -> vector<8x128xf32>
    %282 = vector.extract_strided_slice %0 {offsets = [8, 0], sizes = [1, 128], strides = [1, 1]} : vector<9x128xf32> to vector<1x128xf32>
    %cst_120 = arith.constant 5.000000e-01 : f32
    %283 = vector.broadcast %cst_120 : f32 to vector<1x128xf32>
    %284 = arith.cmpf ogt, %282, %283 : vector<1x128xf32>
    %cst_121 = arith.constant 0.000000e+00 : f32
    %285 = vector.shape_cast %284 : vector<1x128xi1> to vector<1x128xi1>
    %286 = vector.broadcast %285 : vector<1x128xi1> to vector<8x128xi1>
    %287 = vector.broadcast %cst_121 : f32 to vector<8x128xf32>
    %288 = arith.select %286, %281, %287 : vector<8x128xi1>, vector<8x128xf32>
    %289 = arith.truncf %288 : vector<8x128xf32> to vector<8x128xbf16>
    %c8_122 = arith.constant 8 : index
    %c0_123 = arith.constant 0 : index
    %c0_124 = arith.constant 0 : index
    %290 = vector.load %arg6[%c8_122, %c0_123, %c0_124] : memref<9x8x8xf32, #tpu.memory_space<vmem>>, vector<1x8x8xf32>
    %291 = vector.shape_cast %290 : vector<1x8x8xf32> to vector<8x8xf32>
    %292 = arith.truncf %291 : vector<8x8xf32> to vector<8x8xbf16>
    %cst_125 = arith.constant dense<0.000000e+00> : vector<8x128xf32>
    %293 = tpu.matmul %292, %289, %cst_125 {dimension_numbers = #tpu.dot_dimension_numbers<[1], [0], [0], [1], [0, 0, 1, 1], [], []>} : vector<8x8xbf16>, vector<8x128xbf16>, vector<8x128xf32> -> vector<8x128xf32>
    %294 = arith.addf %280, %293 : vector<8x128xf32>
    %cst_126 = arith.constant 0.000000e+00 : f32
    %295 = vector.shape_cast %3 : vector<1x128xi1> to vector<1x128xi1>
    %296 = vector.broadcast %295 : vector<1x128xi1> to vector<8x128xi1>
    %297 = vector.broadcast %cst_126 : f32 to vector<8x128xf32>
    %298 = arith.select %296, %294, %297 : vector<8x128xi1>, vector<8x128xf32>
    %cst_127 = arith.constant dense<0.000000e+00> : vector<8xf32>
    %299 = vector.multi_reduction <add>, %298, %cst_127 [1] : vector<8x128xf32> to vector<8xf32>
    %300 = vector.shape_cast %299 : vector<8xf32> to vector<8x1xf32>
    %cst_128 = arith.constant 7.812500e-03 : f32
    %301 = vector.broadcast %cst_128 : f32 to vector<8x1xf32>
    %302 = arith.mulf %300, %301 : vector<8x1xf32>
    %303 = vector.broadcast %302 : vector<8x1xf32> to vector<8x128xf32>
    %304 = arith.subf %294, %303 : vector<8x128xf32>
    %cst_129 = arith.constant 0.000000e+00 : f32
    %305 = vector.shape_cast %3 : vector<1x128xi1> to vector<1x128xi1>
    %306 = vector.broadcast %305 : vector<1x128xi1> to vector<8x128xi1>
    %307 = vector.broadcast %cst_129 : f32 to vector<8x128xf32>
    %308 = arith.select %306, %304, %307 : vector<8x128xi1>, vector<8x128xf32>
    %309 = arith.mulf %308, %308 : vector<8x128xf32>
    %cst_130 = arith.constant dense<0.000000e+00> : vector<8xf32>
    %310 = vector.multi_reduction <add>, %309, %cst_130 [1] : vector<8x128xf32> to vector<8xf32>
    %311 = vector.shape_cast %310 : vector<8xf32> to vector<8x1xf32>
    %cst_131 = arith.constant 7.812500e-03 : f32
    %312 = vector.broadcast %cst_131 : f32 to vector<8x1xf32>
    %313 = arith.mulf %311, %312 : vector<8x1xf32>
    %314 = vector.broadcast %302 : vector<8x1xf32> to vector<8x128xf32>
    %315 = arith.subf %294, %314 : vector<8x128xf32>
    %cst_132 = arith.constant 9.99999974E-6 : f32
    %316 = vector.broadcast %cst_132 : f32 to vector<8x1xf32>
    %317 = arith.addf %313, %316 : vector<8x1xf32>
    %318 = math.rsqrt %317 : vector<8x1xf32>
    %319 = vector.broadcast %318 : vector<8x1xf32> to vector<8x128xf32>
    %320 = arith.mulf %315, %319 : vector<8x128xf32>
    %c0_133 = arith.constant 0 : index
    %c0_134 = arith.constant 0 : index
    %321 = vector.load %arg7[%c0_133, %c0_134] : memref<8x1xf32, #tpu.memory_space<vmem>>, vector<8x1xf32>
    %322 = vector.broadcast %321 : vector<8x1xf32> to vector<8x128xf32>
    %323 = arith.mulf %320, %322 : vector<8x128xf32>
    %c0_135 = arith.constant 0 : index
    %c0_136 = arith.constant 0 : index
    %324 = vector.load %arg8[%c0_135, %c0_136] : memref<8x1xf32, #tpu.memory_space<vmem>>, vector<8x1xf32>
    %325 = vector.broadcast %324 : vector<8x1xf32> to vector<8x128xf32>
    %326 = arith.addf %323, %325 : vector<8x128xf32>
    %cst_137 = arith.constant 0.000000e+00 : f32
    %327 = vector.broadcast %cst_137 : f32 to vector<8x128xf32>
    %328 = arith.maximumf %326, %327 : vector<8x128xf32>
    %cst_138 = arith.constant 0.000000e+00 : f32
    %329 = vector.shape_cast %3 : vector<1x128xi1> to vector<1x128xi1>
    %330 = vector.broadcast %329 : vector<1x128xi1> to vector<8x128xi1>
    %331 = vector.broadcast %cst_138 : f32 to vector<8x128xf32>
    %332 = arith.select %330, %328, %331 : vector<8x128xi1>, vector<8x128xf32>
    %c0_139 = arith.constant 0 : index
    %c0_140 = arith.constant 0 : index
    %333 = vector.load %arg9[%c0_139, %c0_140] : memref<8x128xf32, #tpu.memory_space<vmem>>, vector<8x128xf32>
    tpu.vector_store %arg9[%c0_139, %c0_140], %332 {strides = array<i32>} : memref<8x128xf32, #tpu.memory_space<vmem>>, vector<8x128xf32>,
    return
  }
  func.func @transform_0(%arg0: i32) -> (i32, i32) {
    %c0_i32 = arith.constant 0 : i32
    %c0_i32_0 = arith.constant 0 : i32
    %c0_i32_1 = arith.constant 0 : i32
    return %c0_i32, %c0_i32_0 : i32, i32
  }
  func.func @transform_1(%arg0: i32) -> (i32, i32) {
    %c0_i32 = arith.constant 0 : i32
    %c0_i32_0 = arith.constant 0 : i32
    %c0_i32_1 = arith.constant 0 : i32
    return %c0_i32, %c0_i32_0 : i32, i32
  }
  func.func @transform_2(%arg0: i32) -> (i32, i32, i32) {
    %c0_i32 = arith.constant 0 : i32
    %c0_i32_0 = arith.constant 0 : i32
    %c0_i32_1 = arith.constant 0 : i32
    %c0_i32_2 = arith.constant 0 : i32
    return %c0_i32, %c0_i32_0, %c0_i32_1 : i32, i32, i32
  }
  func.func @transform_3(%arg0: i32) -> (i32, i32) {
    %c0_i32 = arith.constant 0 : i32
    %c0_i32_0 = arith.constant 0 : i32
    %c0_i32_1 = arith.constant 0 : i32
    return %c0_i32, %c0_i32_0 : i32, i32
  }
  func.func @transform_4(%arg0: i32) -> (i32, i32) {
    %c0_i32 = arith.constant 0 : i32
    %c0_i32_0 = arith.constant 0 : i32
    %c0_i32_1 = arith.constant 0 : i32
    return %c0_i32, %c0_i32_0 : i32, i32
  }
  func.func @transform_5(%arg0: i32) -> (i32, i32, i32) {
    %c0_i32 = arith.constant 0 : i32
    %c0_i32_0 = arith.constant 0 : i32
    %c0_i32_1 = arith.constant 0 : i32
    %c0_i32_2 = arith.constant 0 : i32
    return %c0_i32, %c0_i32_0, %c0_i32_1 : i32, i32, i32
  }
  func.func @transform_6(%arg0: i32) -> (i32, i32) {
    %c0_i32 = arith.constant 0 : i32
    %c0_i32_0 = arith.constant 0 : i32
    %c0_i32_1 = arith.constant 0 : i32
    return %c0_i32, %c0_i32_0 : i32, i32
  }
  func.func @transform_7(%arg0: i32) -> (i32, i32) {
    %c0_i32 = arith.constant 0 : i32
    %c0_i32_0 = arith.constant 0 : i32
    %c0_i32_1 = arith.constant 0 : i32
    return %c0_i32, %c0_i32_0 : i32, i32
  }
  func.func @transform_8(%arg0: i32) -> (i32, i32) {
    %c0_i32 = arith.constant 0 : i32
    %c0_i32_0 = arith.constant 0 : i32
    %c0_i32_1 = arith.constant 0 : i32
    return %c0_i32, %c0_i32_0 : i32, i32
  }
}

</mosaic_0001>

<llo_original>
// kernel: tpu_custom_call.1
$region0: #{tpu_custom_call.1}
  #allocation0 [shape = 'u32[]', space=smem, size = 0x4, offset = 0x4, fixed_abs, tag = 'smem constant byte address 0x4 - core index']
  #allocation1 [shape = 'u32[144,128]{1,0:T(1,128)}', space=vmem, size = 0x12000, scoped, tag = 'internal scratch']
  %s0 = inlined_call_operand.vmem [shape: f32[4,128], index: 0, kind: input, shape index: {}]
  %s1 = inlined_call_operand.vmem [shape: f32[9,128], index: 1, kind: input, shape index: {}]
  %s2 = inlined_call_operand.vmem [shape: f32[9,8,4], index: 2, kind: input, shape index: {}]
  %s3 = inlined_call_operand.vmem [shape: f32[8,1], index: 3, kind: input, shape index: {}]
  %s4 = inlined_call_operand.vmem [shape: f32[8,1], index: 4, kind: input, shape index: {}]
  %s5 = inlined_call_operand.vmem [shape: f32[9,8,8], index: 5, kind: input, shape index: {}]
  %s6 = inlined_call_operand.vmem [shape: f32[8,1], index: 6, kind: input, shape index: {}]
  %s7 = inlined_call_operand.vmem [shape: f32[8,1], index: 7, kind: input, shape index: {}]
  %s8 = inlined_call_operand.hbm [shape: f32[8,128], index: 8, kind: output, shape index: {}]
  %s9 = sld [smem:[#allocation0]]
  $region42: #{tpu_custom_call.1} parent=0
    _
  %s11 = ssub.s32 1, %s9
  %s12 = scalar_select 0, %s11, %s9
  $region1: #{tpu_custom_call.1} parent=0
    #allocation2 [shape = 'u8[4096]{0}', space=vmem, size = 0x1000, scoped, tag = 'output window, operand 0, single buffered']
    #allocation3 [shape = 's32[1]{0}', space=sflag, size = 0x4, scoped, tag = 'scoped memory for tpu_custom_call.1']
    %13 = vsyncpa [#allocation3], 0
    // Predicated region
    $region2: #{tpu_custom_call.1} parent=1 // pred_check
      _
    $region3: #{tpu_custom_call.1} parent=1 // pred_check_branch
      %15 = sbr.rel (0) target = $region5
    $region4: #{tpu_custom_call.1} parent=1 // pred_region
      _
    $region5: #{tpu_custom_call.1} parent=1 // pred_fallthru
      _
    // Predicated region
    $region6: #{tpu_custom_call.1} parent=1 // pred_check
      _
    $region7: #{tpu_custom_call.1} parent=1 // pred_check_branch
      %17 = sbr.rel (0) target = $region9
    $region8: #{tpu_custom_call.1} parent=1 // pred_region
      _
    $region9: #{tpu_custom_call.1} parent=1 // pred_fallthru
      _
    // Predicated region
    $region10: #{tpu_custom_call.1} parent=1 // pred_check
      _
    $region11: #{tpu_custom_call.1} parent=1 // pred_check_branch
      %19 = sbr.rel (0) target = $region13
    $region12: #{tpu_custom_call.1} parent=1 // pred_region
      _
    $region13: #{tpu_custom_call.1} parent=1 // pred_fallthru
      _
    // Predicated region
    $region14: #{tpu_custom_call.1} parent=1 // pred_check
      _
    $region15: #{tpu_custom_call.1} parent=1 // pred_check_branch
      %21 = sbr.rel (0) target = $region17
    $region16: #{tpu_custom_call.1} parent=1 // pred_region
      _
    $region17: #{tpu_custom_call.1} parent=1 // pred_fallthru
      _
    // Predicated region
    $region18: #{tpu_custom_call.1} parent=1 // pred_check
      _
    $region19: #{tpu_custom_call.1} parent=1 // pred_check_branch
      %23 = sbr.rel (0) target = $region21
    $region20: #{tpu_custom_call.1} parent=1 // pred_region
      _
    $region21: #{tpu_custom_call.1} parent=1 // pred_fallthru
      _
    // Predicated region
    $region22: #{tpu_custom_call.1} parent=1 // pred_check
      _
    $region23: #{tpu_custom_call.1} parent=1 // pred_check_branch
      %25 = sbr.rel (0) target = $region25
    $region24: #{tpu_custom_call.1} parent=1 // pred_region
      _
    $region25: #{tpu_custom_call.1} parent=1 // pred_fallthru
      _
    // Predicated region
    $region26: #{tpu_custom_call.1} parent=1 // pred_check
      _
    $region27: #{tpu_custom_call.1} parent=1 // pred_check_branch
      %27 = sbr.rel (0) target = $region29
    $region28: #{tpu_custom_call.1} parent=1 // pred_region
      _
    $region29: #{tpu_custom_call.1} parent=1 // pred_fallthru
      _
    // Predicated region
    $region30: #{tpu_custom_call.1} parent=1 // pred_check
      _
    $region31: #{tpu_custom_call.1} parent=1 // pred_check_branch
      %29 = sbr.rel (0) target = $region33
    $region32: #{tpu_custom_call.1} parent=1 // pred_region
      _
    $region33: #{tpu_custom_call.1} parent=1 // pred_fallthru
      _
    %v31 = vld [vmem:[%s1] sm:$0xff]
    %v32 = vld [vmem:[%s1 + $0x8] sm:$0x1]
    %vm33 = vcmp.gt.f32.partialorder %v31, 0.5
    %v34 = vld [vmem:[%s0] sm:$0xf]
    %35 = vrot.lane.b32.xlu0 %v34, 9
    %v36 = vpop.permute.xlu0 %35
    %v37 = vsel %vm33, 1, 0
    %v38 = vlaneseq
    %v39 = vshrl.u32 %v38, 7
    %v40 = vsub.s32 0, %v39
    %v41 = vrot.slane %v37, %v40
    %vm42 = vcmp.eq.s32.totalorder %v41, 1
    %v43 = vsel %vm42, %v36, 0.0
    %v44 = vpack.c.bf16 %v43, %v43
    %v45 = vld [vmem:[%s2] sm:$0xff]
    %v46 = vpack.c.bf16 %v45, %v45
    %47 = vrot.lane.b32.xlu0 %v34, 8
    %v48 = vpop.permute.xlu0 %47
    %v49 = vlaneseq
    %v50 = vshrl.u32 %v49, 7
    %v51 = vsub.s32 1, %v50
    %v52 = vrot.slane %v37, %v51
    %vm53 = vcmp.eq.s32.totalorder %v52, 1
    %v54 = vsel %vm53, %v48, 0.0
    %v55 = vpack.c.bf16 %v54, %v54
    %s56 = scalar_lea.vmem %s2, 8
    %v57 = vld [vmem:[%s56] sm:$0xff]
    %v58 = vpack.c.bf16 %v57, %v57
    %vm59 = vcmask 31744
    %v61 = vsel %vm59, %v58, 0
    %vm63 = vcmask 1041408
    %v65 = vsel %vm63, %v55, 0
    %67 = vmatprep.subr.bf16.mxu0 0
    %68 = vmatpush1.bf16.msra.mxu0 %v65
    %69 = vmatprep.subr.bf16.mxu0 0
    %70 = vmatpush1.bf16.msra.mxu0 0
    %71 = vmatprep.subr.bf16.mxu0 0
    %72 = vmatpush1.bf16.msra.mxu0 0
    %73 = vmatprep.subr.bf16.mxu0 0
    %74 = vmatpush1.bf16.msra.mxu0 0
    %75 = vmatprep.subr.bf16.mxu0 0
    %76 = vmatpush1.bf16.msra.mxu0 0
    %77 = vmatprep.subr.bf16.mxu0 0
    %78 = vmatpush1.bf16.msra.mxu0 0
    %79 = vmatprep.subr.bf16.mxu0 0
    %80 = vmatpush1.bf16.msra.mxu0 0
    %81 = vmatprep.subr.bf16.mxu0 0
    %82 = vmatpush1.bf16.msra.mxu0 0
    %83 = vmatprep.subr.bf16.mxu0 0
    %84 = vmatpush1.bf16.msra.mxu0 0
    %85 = vmatprep.subr.bf16.mxu0 0
    %86 = vmatpush1.bf16.msra.mxu0 0
    %87 = vmatprep.subr.bf16.mxu0 0
    %88 = vmatpush1.bf16.msra.mxu0 0
    %89 = vmatprep.subr.bf16.mxu0 0
    %90 = vmatpush1.bf16.msra.mxu0 0
    %91 = vmatprep.subr.bf16.mxu0 0
    %92 = vmatpush1.bf16.msra.mxu0 0
    %93 = vmatprep.subr.bf16.mxu0 0
    %94 = vmatpush1.bf16.msra.mxu0 0
    %95 = vmatprep.subr.bf16.mxu0 0
    %96 = vmatpush1.bf16.msra.mxu0 0
    %97 = vmatprep.subr.bf16.mxu0 0
    %98 = vmatpush1.bf16.msra.mxu0 0
    %99 = vmatprep.mubr.bf16.mxu0 0
    %100 = vmatmul.mubr.bf16.gmra.mrb[0].mxu0 %v61
    %v101 = vpop.f32.mrb[0].mxu0
    %v102 = vadd.f32 0.0, %v101
    %v103 = vpop.f32.mrb[0].mxu0
    %v104 = vpop.f32.mrb[0].mxu0
    %v105 = vpop.f32.mrb[0].mxu0
    %106 = vdwg.mxu0
    %v108 = vsel %vm59, %v46, 0
    %v111 = vsel %vm63, %v44, 0
    %113 = vmatprep.subr.bf16.mxu0 0
    %114 = vmatpush1.bf16.msra.mxu0 %v111
    %115 = vmatprep.subr.bf16.mxu0 0
    %116 = vmatpush1.bf16.msra.mxu0 0
    %117 = vmatprep.subr.bf16.mxu0 0
    %118 = vmatpush1.bf16.msra.mxu0 0
    %119 = vmatprep.subr.bf16.mxu0 0
    %120 = vmatpush1.bf16.msra.mxu0 0
    %121 = vmatprep.subr.bf16.mxu0 0
    %122 = vmatpush1.bf16.msra.mxu0 0
    %123 = vmatprep.subr.bf16.mxu0 0
    %124 = vmatpush1.bf16.msra.mxu0 0
    %125 = vmatprep.subr.bf16.mxu0 0
    %126 = vmatpush1.bf16.msra.mxu0 0
    %127 = vmatprep.subr.bf16.mxu0 0
    %128 = vmatpush1.bf16.msra.mxu0 0
    %129 = vmatprep.subr.bf16.mxu0 0
    %130 = vmatpush1.bf16.msra.mxu0 0
    %131 = vmatprep.subr.bf16.mxu0 0
    %132 = vmatpush1.bf16.msra.mxu0 0
    %133 = vmatprep.subr.bf16.mxu0 0
    %134 = vmatpush1.bf16.msra.mxu0 0
    %135 = vmatprep.subr.bf16.mxu0 0
    %136 = vmatpush1.bf16.msra.mxu0 0
    %137 = vmatprep.subr.bf16.mxu0 0
    %138 = vmatpush1.bf16.msra.mxu0 0
    %139 = vmatprep.subr.bf16.mxu0 0
    %140 = vmatpush1.bf16.msra.mxu0 0
    %141 = vmatprep.subr.bf16.mxu0 0
    %142 = vmatpush1.bf16.msra.mxu0 0
    %143 = vmatprep.subr.bf16.mxu0 0
    %144 = vmatpush1.bf16.msra.mxu0 0
    %145 = vmatprep.mubr.bf16.mxu0 0
    %146 = vmatmul.mubr.bf16.gmra.mrb[0].mxu0 %v108
    %v147 = vpop.f32.mrb[0].mxu0
    %v148 = vadd.f32 %v102, %v147
    %v149 = vpop.f32.mrb[0].mxu0
    %v150 = vpop.f32.mrb[0].mxu0
    %v151 = vpop.f32.mrb[0].mxu0
    %152 = vdwg.mxu0
    %153 = vrot.lane.b32.xlu0 %v34, 7
    %v154 = vpop.permute.xlu0 %153
    %v155 = vlaneseq
    %v156 = vshrl.u32 %v155, 7
    %v157 = vsub.s32 2, %v156
    %v158 = vrot.slane %v37, %v157
    %vm159 = vcmp.eq.s32.totalorder %v158, 1
    %v160 = vsel %vm159, %v154, 0.0
    %v161 = vpack.c.bf16 %v160, %v160
    %s162 = scalar_lea.vmem %s2, 16
    %v163 = vld [vmem:[%s162] sm:$0xff]
    %v164 = vpack.c.bf16 %v163, %v163
    %v166 = vsel %vm59, %v164, 0
    %v169 = vsel %vm63, %v161, 0
    %171 = vmatprep.subr.bf16.mxu0 0
    %172 = vmatpush1.bf16.msra.mxu0 %v169
    %173 = vmatprep.subr.bf16.mxu0 0
    %174 = vmatpush1.bf16.msra.mxu0 0
    %175 = vmatprep.subr.bf16.mxu0 0
    %176 = vmatpush1.bf16.msra.mxu0 0
    %177 = vmatprep.subr.bf16.mxu0 0
    %178 = vmatpush1.bf16.msra.mxu0 0
    %179 = vmatprep.subr.bf16.mxu0 0
    %180 = vmatpush1.bf16.msra.mxu0 0
    %181 = vmatprep.subr.bf16.mxu0 0
    %182 = vmatpush1.bf16.msra.mxu0 0
    %183 = vmatprep.subr.bf16.mxu0 0
    %184 = vmatpush1.bf16.msra.mxu0 0
    %185 = vmatprep.subr.bf16.mxu0 0
    %186 = vmatpush1.bf16.msra.mxu0 0
    %187 = vmatprep.subr.bf16.mxu0 0
    %188 = vmatpush1.bf16.msra.mxu0 0
    %189 = vmatprep.subr.bf16.mxu0 0
    %190 = vmatpush1.bf16.msra.mxu0 0
    %191 = vmatprep.subr.bf16.mxu0 0
    %192 = vmatpush1.bf16.msra.mxu0 0
    %193 = vmatprep.subr.bf16.mxu0 0
    %194 = vmatpush1.bf16.msra.mxu0 0
    %195 = vmatprep.subr.bf16.mxu0 0
    %196 = vmatpush1.bf16.msra.mxu0 0
    %197 = vmatprep.subr.bf16.mxu0 0
    %198 = vmatpush1.bf16.msra.mxu0 0
    %199 = vmatprep.subr.bf16.mxu0 0
    %200 = vmatpush1.bf16.msra.mxu0 0
    %201 = vmatprep.subr.bf16.mxu0 0
    %202 = vmatpush1.bf16.msra.mxu0 0
    %203 = vmatprep.mubr.bf16.mxu0 0
    %204 = vmatmul.mubr.bf16.gmra.mrb[0].mxu0 %v166
    %v205 = vpop.f32.mrb[0].mxu0
    %v206 = vadd.f32 0.0, %v205
    %v207 = vpop.f32.mrb[0].mxu0
    %v208 = vpop.f32.mrb[0].mxu0
    %v209 = vpop.f32.mrb[0].mxu0
    %210 = vdwg.mxu0
    %v211 = vadd.f32 %v148, %v206
    %212 = vrot.lane.b32.xlu0 %v34, 1
    %v213 = vpop.permute.xlu0 %212
    %v214 = vlaneseq
    %v215 = vshrl.u32 %v214, 7
    %v216 = vsub.s32 3, %v215
    %v217 = vrot.slane %v37, %v216
    %vm218 = vcmp.eq.s32.totalorder %v217, 1
    %v219 = vsel %vm218, %v213, 0.0
    %v220 = vpack.c.bf16 %v219, %v219
    %s221 = scalar_lea.vmem %s2, 24
    %v222 = vld [vmem:[%s221] sm:$0xff]
    %v223 = vpack.c.bf16 %v222, %v222
    %v225 = vsel %vm59, %v223, 0
    %v228 = vsel %vm63, %v220, 0
    %230 = vmatprep.subr.bf16.mxu0 0
    %231 = vmatpush1.bf16.msra.mxu0 %v228
    %232 = vmatprep.subr.bf16.mxu0 0
    %233 = vmatpush1.bf16.msra.mxu0 0
    %234 = vmatprep.subr.bf16.mxu0 0
    %235 = vmatpush1.bf16.msra.mxu0 0
    %236 = vmatprep.subr.bf16.mxu0 0
    %237 = vmatpush1.bf16.msra.mxu0 0
    %238 = vmatprep.subr.bf16.mxu0 0
    %239 = vmatpush1.bf16.msra.mxu0 0
    %240 = vmatprep.subr.bf16.mxu0 0
    %241 = vmatpush1.bf16.msra.mxu0 0
    %242 = vmatprep.subr.bf16.mxu0 0
    %243 = vmatpush1.bf16.msra.mxu0 0
    %244 = vmatprep.subr.bf16.mxu0 0
    %245 = vmatpush1.bf16.msra.mxu0 0
    %246 = vmatprep.subr.bf16.mxu0 0
    %247 = vmatpush1.bf16.msra.mxu0 0
    %248 = vmatprep.subr.bf16.mxu0 0
    %249 = vmatpush1.bf16.msra.mxu0 0
    %250 = vmatprep.subr.bf16.mxu0 0
    %251 = vmatpush1.bf16.msra.mxu0 0
    %252 = vmatprep.subr.bf16.mxu0 0
    %253 = vmatpush1.bf16.msra.mxu0 0
    %254 = vmatprep.subr.bf16.mxu0 0
    %255 = vmatpush1.bf16.msra.mxu0 0
    %256 = vmatprep.subr.bf16.mxu0 0
    %257 = vmatpush1.bf16.msra.mxu0 0
    %258 = vmatprep.subr.bf16.mxu0 0
    %259 = vmatpush1.bf16.msra.mxu0 0
    %260 = vmatprep.subr.bf16.mxu0 0
    %261 = vmatpush1.bf16.msra.mxu0 0
    %262 = vmatprep.mubr.bf16.mxu0 0
    %263 = vmatmul.mubr.bf16.gmra.mrb[0].mxu0 %v225
    %v264 = vpop.f32.mrb[0].mxu0
    %v265 = vadd.f32 0.0, %v264
    %v266 = vpop.f32.mrb[0].mxu0
    %v267 = vpop.f32.mrb[0].mxu0
    %v268 = vpop.f32.mrb[0].mxu0
    %269 = vdwg.mxu0
    %v270 = vadd.f32 %v211, %v265
    %v271 = vlaneseq
    %v272 = vshrl.u32 %v271, 7
    %v273 = vsub.s32 4, %v272
    %v274 = vrot.slane %v37, %v273
    %vm275 = vcmp.eq.s32.totalorder %v274, 1
    %v276 = vsel %vm275, %v34, 0.0
    %v277 = vpack.c.bf16 %v276, %v276
    %s278 = scalar_lea.vmem %s2, 32
    %v279 = vld [vmem:[%s278] sm:$0xff]
    %v280 = vpack.c.bf16 %v279, %v279
    %v282 = vsel %vm59, %v280, 0
    %v285 = vsel %vm63, %v277, 0
    %287 = vmatprep.subr.bf16.mxu0 0
    %288 = vmatpush1.bf16.msra.mxu0 %v285
    %289 = vmatprep.subr.bf16.mxu0 0
    %290 = vmatpush1.bf16.msra.mxu0 0
    %291 = vmatprep.subr.bf16.mxu0 0
    %292 = vmatpush1.bf16.msra.mxu0 0
    %293 = vmatprep.subr.bf16.mxu0 0
    %294 = vmatpush1.bf16.msra.mxu0 0
    %295 = vmatprep.subr.bf16.mxu0 0
    %296 = vmatpush1.bf16.msra.mxu0 0
    %297 = vmatprep.subr.bf16.mxu0 0
    %298 = vmatpush1.bf16.msra.mxu0 0
    %299 = vmatprep.subr.bf16.mxu0 0
    %300 = vmatpush1.bf16.msra.mxu0 0
    %301 = vmatprep.subr.bf16.mxu0 0
    %302 = vmatpush1.bf16.msra.mxu0 0
    %303 = vmatprep.subr.bf16.mxu0 0
    %304 = vmatpush1.bf16.msra.mxu0 0
    %305 = vmatprep.subr.bf16.mxu0 0
    %306 = vmatpush1.bf16.msra.mxu0 0
    %307 = vmatprep.subr.bf16.mxu0 0
    %308 = vmatpush1.bf16.msra.mxu0 0
    %309 = vmatprep.subr.bf16.mxu0 0
    %310 = vmatpush1.bf16.msra.mxu0 0
    %311 = vmatprep.subr.bf16.mxu0 0
    %312 = vmatpush1.bf16.msra.mxu0 0
    %313 = vmatprep.subr.bf16.mxu0 0
    %314 = vmatpush1.bf16.msra.mxu0 0
    %315 = vmatprep.subr.bf16.mxu0 0
    %316 = vmatpush1.bf16.msra.mxu0 0
    %317 = vmatprep.subr.bf16.mxu0 0
    %318 = vmatpush1.bf16.msra.mxu0 0
    %319 = vmatprep.mubr.bf16.mxu0 0
    %320 = vmatmul.mubr.bf16.gmra.mrb[0].mxu0 %v282
    %v321 = vpop.f32.mrb[0].mxu0
    %v322 = vadd.f32 0.0, %v321
    %v323 = vpop.f32.mrb[0].mxu0
    %v324 = vpop.f32.mrb[0].mxu0
    %v325 = vpop.f32.mrb[0].mxu0
    %326 = vdwg.mxu0
    %v327 = vadd.f32 %v270, %v322
    %328 = vrot.lane.b32.xlu0 %v34, 127
    %v329 = vpop.permute.xlu0 %328
    %v330 = vlaneseq
    %v331 = vshrl.u32 %v330, 7
    %v332 = vsub.s32 5, %v331
    %v333 = vrot.slane %v37, %v332
    %vm334 = vcmp.eq.s32.totalorder %v333, 1
    %v335 = vsel %vm334, %v329, 0.0
    %v336 = vpack.c.bf16 %v335, %v335
    %s337 = scalar_lea.vmem %s2, 40
    %v338 = vld [vmem:[%s337] sm:$0xff]
    %v339 = vpack.c.bf16 %v338, %v338
    %v341 = vsel %vm59, %v339, 0
    %v344 = vsel %vm63, %v336, 0
    %346 = vmatprep.subr.bf16.mxu0 0
    %347 = vmatpush1.bf16.msra.mxu0 %v344
    %348 = vmatprep.subr.bf16.mxu0 0
    %349 = vmatpush1.bf16.msra.mxu0 0
    %350 = vmatprep.subr.bf16.mxu0 0
    %351 = vmatpush1.bf16.msra.mxu0 0
    %352 = vmatprep.subr.bf16.mxu0 0
    %353 = vmatpush1.bf16.msra.mxu0 0
    %354 = vmatprep.subr.bf16.mxu0 0
    %355 = vmatpush1.bf16.msra.mxu0 0
    %356 = vmatprep.subr.bf16.mxu0 0
    %357 = vmatpush1.bf16.msra.mxu0 0
    %358 = vmatprep.subr.bf16.mxu0 0
    %359 = vmatpush1.bf16.msra.mxu0 0
    %360 = vmatprep.subr.bf16.mxu0 0
    %361 = vmatpush1.bf16.msra.mxu0 0
    %362 = vmatprep.subr.bf16.mxu0 0
    %363 = vmatpush1.bf16.msra.mxu0 0
    %364 = vmatprep.subr.bf16.mxu0 0
    %365 = vmatpush1.bf16.msra.mxu0 0
    %366 = vmatprep.subr.bf16.mxu0 0
    %367 = vmatpush1.bf16.msra.mxu0 0
    %368 = vmatprep.subr.bf16.mxu0 0
    %369 = vmatpush1.bf16.msra.mxu0 0
    %370 = vmatprep.subr.bf16.mxu0 0
    %371 = vmatpush1.bf16.msra.mxu0 0
    %372 = vmatprep.subr.bf16.mxu0 0
    %373 = vmatpush1.bf16.msra.mxu0 0
    %374 = vmatprep.subr.bf16.mxu0 0
    %375 = vmatpush1.bf16.msra.mxu0 0
    %376 = vmatprep.subr.bf16.mxu0 0
    %377 = vmatpush1.bf16.msra.mxu0 0
    %378 = vmatprep.mubr.bf16.mxu0 0
    %379 = vmatmul.mubr.bf16.gmra.mrb[0].mxu0 %v341
    %v380 = vpop.f32.mrb[0].mxu0
    %v381 = vadd.f32 0.0, %v380
    %v382 = vpop.f32.mrb[0].mxu0
    %v383 = vpop.f32.mrb[0].mxu0
    %v384 = vpop.f32.mrb[0].mxu0
    %385 = vdwg.mxu0
    %v386 = vadd.f32 %v327, %v381
    %387 = vrot.lane.b32.xlu0 %v34, 121
    %v388 = vpop.permute.xlu0 %387
    %v389 = vlaneseq
    %v390 = vshrl.u32 %v389, 7
    %v391 = vsub.s32 6, %v390
    %v392 = vrot.slane %v37, %v391
    %vm393 = vcmp.eq.s32.totalorder %v392, 1
    %v394 = vsel %vm393, %v388, 0.0
    %v395 = vpack.c.bf16 %v394, %v394
    %s396 = scalar_lea.vmem %s2, 48
    %v397 = vld [vmem:[%s396] sm:$0xff]
    %v398 = vpack.c.bf16 %v397, %v397
    %v400 = vsel %vm59, %v398, 0
    %v403 = vsel %vm63, %v395, 0
    %405 = vmatprep.subr.bf16.mxu0 0
    %406 = vmatpush1.bf16.msra.mxu0 %v403
    %407 = vmatprep.subr.bf16.mxu0 0
    %408 = vmatpush1.bf16.msra.mxu0 0
    %409 = vmatprep.subr.bf16.mxu0 0
    %410 = vmatpush1.bf16.msra.mxu0 0
    %411 = vmatprep.subr.bf16.mxu0 0
    %412 = vmatpush1.bf16.msra.mxu0 0
    %413 = vmatprep.subr.bf16.mxu0 0
    %414 = vmatpush1.bf16.msra.mxu0 0
    %415 = vmatprep.subr.bf16.mxu0 0
    %416 = vmatpush1.bf16.msra.mxu0 0
    %417 = vmatprep.subr.bf16.mxu0 0
    %418 = vmatpush1.bf16.msra.mxu0 0
    %419 = vmatprep.subr.bf16.mxu0 0
    %420 = vmatpush1.bf16.msra.mxu0 0
    %421 = vmatprep.subr.bf16.mxu0 0
    %422 = vmatpush1.bf16.msra.mxu0 0
    %423 = vmatprep.subr.bf16.mxu0 0
    %424 = vmatpush1.bf16.msra.mxu0 0
    %425 = vmatprep.subr.bf16.mxu0 0
    %426 = vmatpush1.bf16.msra.mxu0 0
    %427 = vmatprep.subr.bf16.mxu0 0
    %428 = vmatpush1.bf16.msra.mxu0 0
    %429 = vmatprep.subr.bf16.mxu0 0
    %430 = vmatpush1.bf16.msra.mxu0 0
    %431 = vmatprep.subr.bf16.mxu0 0
    %432 = vmatpush1.bf16.msra.mxu0 0
    %433 = vmatprep.subr.bf16.mxu0 0
    %434 = vmatpush1.bf16.msra.mxu0 0
    %435 = vmatprep.subr.bf16.mxu0 0
    %436 = vmatpush1.bf16.msra.mxu0 0
    %437 = vmatprep.mubr.bf16.mxu0 0
    %438 = vmatmul.mubr.bf16.gmra.mrb[0].mxu0 %v400
    %v439 = vpop.f32.mrb[0].mxu0
    %v440 = vadd.f32 0.0, %v439
    %v441 = vpop.f32.mrb[0].mxu0
    %v442 = vpop.f32.mrb[0].mxu0
    %v443 = vpop.f32.mrb[0].mxu0
    %444 = vdwg.mxu0
    %v445 = vadd.f32 %v386, %v440
    %446 = vrot.lane.b32.xlu0 %v34, 120
    %v447 = vpop.permute.xlu0 %446
    %v448 = vlaneseq
    %v449 = vshrl.u32 %v448, 7
    %v450 = vsub.s32 7, %v449
    %v451 = vrot.slane %v37, %v450
    %vm452 = vcmp.eq.s32.totalorder %v451, 1
    %v453 = vsel %vm452, %v447, 0.0
    %v454 = vpack.c.bf16 %v453, %v453
    %s455 = scalar_lea.vmem %s2, 56
    %v456 = vld [vmem:[%s455] sm:$0xff]
    %v457 = vpack.c.bf16 %v456, %v456
    %v459 = vsel %vm59, %v457, 0
    %v462 = vsel %vm63, %v454, 0
    %464 = vmatprep.subr.bf16.mxu0 0
    %465 = vmatpush1.bf16.msra.mxu0 %v462
    %466 = vmatprep.subr.bf16.mxu0 0
    %467 = vmatpush1.bf16.msra.mxu0 0
    %468 = vmatprep.subr.bf16.mxu0 0
    %469 = vmatpush1.bf16.msra.mxu0 0
    %470 = vmatprep.subr.bf16.mxu0 0
    %471 = vmatpush1.bf16.msra.mxu0 0
    %472 = vmatprep.subr.bf16.mxu0 0
    %473 = vmatpush1.bf16.msra.mxu0 0
    %474 = vmatprep.subr.bf16.mxu0 0
    %475 = vmatpush1.bf16.msra.mxu0 0
    %476 = vmatprep.subr.bf16.mxu0 0
    %477 = vmatpush1.bf16.msra.mxu0 0
    %478 = vmatprep.subr.bf16.mxu0 0
    %479 = vmatpush1.bf16.msra.mxu0 0
    %480 = vmatprep.subr.bf16.mxu0 0
    %481 = vmatpush1.bf16.msra.mxu0 0
    %482 = vmatprep.subr.bf16.mxu0 0
    %483 = vmatpush1.bf16.msra.mxu0 0
    %484 = vmatprep.subr.bf16.mxu0 0
    %485 = vmatpush1.bf16.msra.mxu0 0
    %486 = vmatprep.subr.bf16.mxu0 0
    %487 = vmatpush1.bf16.msra.mxu0 0
    %488 = vmatprep.subr.bf16.mxu0 0
    %489 = vmatpush1.bf16.msra.mxu0 0
    %490 = vmatprep.subr.bf16.mxu0 0
    %491 = vmatpush1.bf16.msra.mxu0 0
    %492 = vmatprep.subr.bf16.mxu0 0
    %493 = vmatpush1.bf16.msra.mxu0 0
    %494 = vmatprep.subr.bf16.mxu0 0
    %495 = vmatpush1.bf16.msra.mxu0 0
    %496 = vmatprep.mubr.bf16.mxu0 0
    %497 = vmatmul.mubr.bf16.gmra.mrb[0].mxu0 %v459
    %v498 = vpop.f32.mrb[0].mxu0
    %v499 = vadd.f32 0.0, %v498
    %v500 = vpop.f32.mrb[0].mxu0
    %v501 = vpop.f32.mrb[0].mxu0
    %v502 = vpop.f32.mrb[0].mxu0
    %503 = vdwg.mxu0
    %v504 = vadd.f32 %v445, %v499
    %505 = vrot.lane.b32.xlu0 %v34, 119
    %v506 = vpop.permute.xlu0 %505
    %vm507 = vcmp.gt.f32.partialorder %v32, 0.5
    %v508 = vsel %vm507, 1, 0
    %v509 = vlaneseq
    %v510 = vshrl.u32 %v509, 7
    %v511 = vsub.s32 0, %v510
    %v512 = vrot.slane %v508, %v511
    %vm513 = vcmp.eq.s32.totalorder %v512, 1
    %v514 = vsel %vm513, %v506, 0.0
    %v515 = vpack.c.bf16 %v514, %v514
    %s516 = scalar_lea.vmem %s2, 64
    %v517 = vld [vmem:[%s516] sm:$0xff]
    %v518 = vpack.c.bf16 %v517, %v517
    %v520 = vsel %vm59, %v518, 0
    %v523 = vsel %vm63, %v515, 0
    %525 = vmatprep.subr.bf16.mxu0 0
    %526 = vmatpush1.bf16.msra.mxu0 %v523
    %527 = vmatprep.subr.bf16.mxu0 0
    %528 = vmatpush1.bf16.msra.mxu0 0
    %529 = vmatprep.subr.bf16.mxu0 0
    %530 = vmatpush1.bf16.msra.mxu0 0
    %531 = vmatprep.subr.bf16.mxu0 0
    %532 = vmatpush1.bf16.msra.mxu0 0
    %533 = vmatprep.subr.bf16.mxu0 0
    %534 = vmatpush1.bf16.msra.mxu0 0
    %535 = vmatprep.subr.bf16.mxu0 0
    %536 = vmatpush1.bf16.msra.mxu0 0
    %537 = vmatprep.subr.bf16.mxu0 0
    %538 = vmatpush1.bf16.msra.mxu0 0
    %539 = vmatprep.subr.bf16.mxu0 0
    %540 = vmatpush1.bf16.msra.mxu0 0
    %541 = vmatprep.subr.bf16.mxu0 0
    %542 = vmatpush1.bf16.msra.mxu0 0
    %543 = vmatprep.subr.bf16.mxu0 0
    %544 = vmatpush1.bf16.msra.mxu0 0
    %545 = vmatprep.subr.bf16.mxu0 0
    %546 = vmatpush1.bf16.msra.mxu0 0
    %547 = vmatprep.subr.bf16.mxu0 0
    %548 = vmatpush1.bf16.msra.mxu0 0
    %549 = vmatprep.subr.bf16.mxu0 0
    %550 = vmatpush1.bf16.msra.mxu0 0
    %551 = vmatprep.subr.bf16.mxu0 0
    %552 = vmatpush1.bf16.msra.mxu0 0
    %553 = vmatprep.subr.bf16.mxu0 0
    %554 = vmatpush1.bf16.msra.mxu0 0
    %555 = vmatprep.subr.bf16.mxu0 0
    %556 = vmatpush1.bf16.msra.mxu0 0
    %557 = vmatprep.mubr.bf16.mxu0 0
    %558 = vmatmul.mubr.bf16.gmra.mrb[0].mxu0 %v520
    %v559 = vpop.f32.mrb[0].mxu0
    %v560 = vadd.f32 0.0, %v559
    %v561 = vpop.f32.mrb[0].mxu0
    %v562 = vpop.f32.mrb[0].mxu0
    %v563 = vpop.f32.mrb[0].mxu0
    %564 = vdwg.mxu0
    %v565 = vadd.f32 %v504, %v560
    %v566 = vsel %vm275, %v565, 0.0
    %567 = vadd.xlane.f32.xlu0 %v566
    %v568 = vpop.xlane.xlu0 %567
    %v569 = vmul.f32 %v568, 0.0078125
    %v570 = vsub.f32 %v565, %v569
    %v571 = vsel %vm275, %v570, 0.0
    %v572 = vmul.f32 %v571, %v571
    %573 = vadd.xlane.f32.xlu0 %v572
    %v574 = vpop.xlane.xlu0 %573
    %v575 = vmul.f32 %v574, 0.0078125
    %v576 = vadd.f32 %v575, 1e-05
    %v577 = vrsqrt.pop %v576
    %v578 = vmul.f32 %v570, %v577
    %v579 = vld [vmem:[%s3] sm:$0xff]
    %581 = vset.pattern.permute.xlu0 0
    %582 = vperm.xlu0 %581, %v579
    %v583 = vpop.permute.xlu0 %582
    %v585 = vmul.f32 %v578, %v583
    %v586 = vld [vmem:[%s4] sm:$0xff]
    %588 = vset.pattern.permute.xlu0 0
    %589 = vperm.xlu0 %588, %v586
    %v590 = vpop.permute.xlu0 %589
    %v592 = vadd.f32 %v585, %v590
    %v593 = vmax.f32 %v592, 0.0
    %v594 = vsel %vm275, %v593, 0.0
    %595 = vrot.lane.b32.xlu0 %v594, 9
    %v596 = vpop.permute.xlu0 %595
    %v597 = vsel %vm42, %v596, 0.0
    %v598 = vpack.c.bf16 %v597, %v597
    %v599 = vld [vmem:[%s5] sm:$0xff]
    %v600 = vpack.c.bf16 %v599, %v599
    %601 = vrot.lane.b32.xlu0 %v594, 8
    %v602 = vpop.permute.xlu0 %601
    %v603 = vsel %vm53, %v602, 0.0
    %v604 = vpack.c.bf16 %v603, %v603
    %s605 = scalar_lea.vmem %s5, 8
    %v606 = vld [vmem:[%s605] sm:$0xff]
    %v607 = vpack.c.bf16 %v606, %v606
    %vm608 = vcmask 64512
    %v610 = vsel %vm608, %v607, 0
    %vm612 = vcmask 1043456
    %v614 = vsel %vm612, %v604, 0
    %616 = vmatprep.subr.bf16.mxu0 0
    %617 = vmatpush1.bf16.msra.mxu0 %v614
    %618 = vmatprep.subr.bf16.mxu0 0
    %619 = vmatpush1.bf16.msra.mxu0 0
    %620 = vmatprep.subr.bf16.mxu0 0
    %621 = vmatpush1.bf16.msra.mxu0 0
    %622 = vmatprep.subr.bf16.mxu0 0
    %623 = vmatpush1.bf16.msra.mxu0 0
    %624 = vmatprep.subr.bf16.mxu0 0
    %625 = vmatpush1.bf16.msra.mxu0 0
    %626 = vmatprep.subr.bf16.mxu0 0
    %627 = vmatpush1.bf16.msra.mxu0 0
    %628 = vmatprep.subr.bf16.mxu0 0
    %629 = vmatpush1.bf16.msra.mxu0 0
    %630 = vmatprep.subr.bf16.mxu0 0
    %631 = vmatpush1.bf16.msra.mxu0 0
    %632 = vmatprep.subr.bf16.mxu0 0
    %633 = vmatpush1.bf16.msra.mxu0 0
    %634 = vmatprep.subr.bf16.mxu0 0
    %635 = vmatpush1.bf16.msra.mxu0 0
    %636 = vmatprep.subr.bf16.mxu0 0
    %637 = vmatpush1.bf16.msra.mxu0 0
    %638 = vmatprep.subr.bf16.mxu0 0
    %639 = vmatpush1.bf16.msra.mxu0 0
    %640 = vmatprep.subr.bf16.mxu0 0
    %641 = vmatpush1.bf16.msra.mxu0 0
    %642 = vmatprep.subr.bf16.mxu0 0
    %643 = vmatpush1.bf16.msra.mxu0 0
    %644 = vmatprep.subr.bf16.mxu0 0
    %645 = vmatpush1.bf16.msra.mxu0 0
    %646 = vmatprep.subr.bf16.mxu0 0
    %647 = vmatpush1.bf16.msra.mxu0 0
    %648 = vmatprep.mubr.bf16.mxu0 0
    %649 = vmatmul.mubr.bf16.gmra.mrb[0].mxu0 %v610
    %v650 = vpop.f32.mrb[0].mxu0
    %v651 = vadd.f32 0.0, %v650
    %v652 = vpop.f32.mrb[0].mxu0
    %v653 = vpop.f32.mrb[0].mxu0
    %v654 = vpop.f32.mrb[0].mxu0
    %655 = vdwg.mxu0
    %v657 = vsel %vm608, %v600, 0
    %v660 = vsel %vm612, %v598, 0
    %662 = vmatprep.subr.bf16.mxu0 0
    %663 = vmatpush1.bf16.msra.mxu0 %v660
    %664 = vmatprep.subr.bf16.mxu0 0
    %665 = vmatpush1.bf16.msra.mxu0 0
    %666 = vmatprep.subr.bf16.mxu0 0
    %667 = vmatpush1.bf16.msra.mxu0 0
    %668 = vmatprep.subr.bf16.mxu0 0
    %669 = vmatpush1.bf16.msra.mxu0 0
    %670 = vmatprep.subr.bf16.mxu0 0
    %671 = vmatpush1.bf16.msra.mxu0 0
    %672 = vmatprep.subr.bf16.mxu0 0
    %673 = vmatpush1.bf16.msra.mxu0 0
    %674 = vmatprep.subr.bf16.mxu0 0
    %675 = vmatpush1.bf16.msra.mxu0 0
    %676 = vmatprep.subr.bf16.mxu0 0
    %677 = vmatpush1.bf16.msra.mxu0 0
    %678 = vmatprep.subr.bf16.mxu0 0
    %679 = vmatpush1.bf16.msra.mxu0 0
    %680 = vmatprep.subr.bf16.mxu0 0
    %681 = vmatpush1.bf16.msra.mxu0 0
    %682 = vmatprep.subr.bf16.mxu0 0
    %683 = vmatpush1.bf16.msra.mxu0 0
    %684 = vmatprep.subr.bf16.mxu0 0
    %685 = vmatpush1.bf16.msra.mxu0 0
    %686 = vmatprep.subr.bf16.mxu0 0
    %687 = vmatpush1.bf16.msra.mxu0 0
    %688 = vmatprep.subr.bf16.mxu0 0
    %689 = vmatpush1.bf16.msra.mxu0 0
    %690 = vmatprep.subr.bf16.mxu0 0
    %691 = vmatpush1.bf16.msra.mxu0 0
    %692 = vmatprep.subr.bf16.mxu0 0
    %693 = vmatpush1.bf16.msra.mxu0 0
    %694 = vmatprep.mubr.bf16.mxu0 0
    %695 = vmatmul.mubr.bf16.gmra.mrb[0].mxu0 %v657
    %v696 = vpop.f32.mrb[0].mxu0
    %v697 = vadd.f32 %v651, %v696
    %v698 = vpop.f32.mrb[0].mxu0
    %v699 = vpop.f32.mrb[0].mxu0
    %v700 = vpop.f32.mrb[0].mxu0
    %701 = vdwg.mxu0
    %702 = vrot.lane.b32.xlu0 %v594, 7
    %v703 = vpop.permute.xlu0 %702
    %v704 = vsel %vm159, %v703, 0.0
    %v705 = vpack.c.bf16 %v704, %v704
    %s706 = scalar_lea.vmem %s5, 16
    %v707 = vld [vmem:[%s706] sm:$0xff]
    %v708 = vpack.c.bf16 %v707, %v707
    %v710 = vsel %vm608, %v708, 0
    %v713 = vsel %vm612, %v705, 0
    %715 = vmatprep.subr.bf16.mxu0 0
    %716 = vmatpush1.bf16.msra.mxu0 %v713
    %717 = vmatprep.subr.bf16.mxu0 0
    %718 = vmatpush1.bf16.msra.mxu0 0
    %719 = vmatprep.subr.bf16.mxu0 0
    %720 = vmatpush1.bf16.msra.mxu0 0
    %721 = vmatprep.subr.bf16.mxu0 0
    %722 = vmatpush1.bf16.msra.mxu0 0
    %723 = vmatprep.subr.bf16.mxu0 0
    %724 = vmatpush1.bf16.msra.mxu0 0
    %725 = vmatprep.subr.bf16.mxu0 0
    %726 = vmatpush1.bf16.msra.mxu0 0
    %727 = vmatprep.subr.bf16.mxu0 0
    %728 = vmatpush1.bf16.msra.mxu0 0
    %729 = vmatprep.subr.bf16.mxu0 0
    %730 = vmatpush1.bf16.msra.mxu0 0
    %731 = vmatprep.subr.bf16.mxu0 0
    %732 = vmatpush1.bf16.msra.mxu0 0
    %733 = vmatprep.subr.bf16.mxu0 0
    %734 = vmatpush1.bf16.msra.mxu0 0
    %735 = vmatprep.subr.bf16.mxu0 0
    %736 = vmatpush1.bf16.msra.mxu0 0
    %737 = vmatprep.subr.bf16.mxu0 0
    %738 = vmatpush1.bf16.msra.mxu0 0
    %739 = vmatprep.subr.bf16.mxu0 0
    %740 = vmatpush1.bf16.msra.mxu0 0
    %741 = vmatprep.subr.bf16.mxu0 0
    %742 = vmatpush1.bf16.msra.mxu0 0
    %743 = vmatprep.subr.bf16.mxu0 0
    %744 = vmatpush1.bf16.msra.mxu0 0
    %745 = vmatprep.subr.bf16.mxu0 0
    %746 = vmatpush1.bf16.msra.mxu0 0
    %747 = vmatprep.mubr.bf16.mxu0 0
    %748 = vmatmul.mubr.bf16.gmra.mrb[0].mxu0 %v710
    %v749 = vpop.f32.mrb[0].mxu0
    %v750 = vadd.f32 0.0, %v749
    %v751 = vpop.f32.mrb[0].mxu0
    %v752 = vpop.f32.mrb[0].mxu0
    %v753 = vpop.f32.mrb[0].mxu0
    %754 = vdwg.mxu0
    %v755 = vadd.f32 %v697, %v750
    %756 = vrot.lane.b32.xlu0 %v594, 1
    %v757 = vpop.permute.xlu0 %756
    %v758 = vsel %vm218, %v757, 0.0
    %v759 = vpack.c.bf16 %v758, %v758
    %s760 = scalar_lea.vmem %s5, 24
    %v761 = vld [vmem:[%s760] sm:$0xff]
    %v762 = vpack.c.bf16 %v761, %v761
    %v764 = vsel %vm608, %v762, 0
    %v767 = vsel %vm612, %v759, 0
    %769 = vmatprep.subr.bf16.mxu0 0
    %770 = vmatpush1.bf16.msra.mxu0 %v767
    %771 = vmatprep.subr.bf16.mxu0 0
    %772 = vmatpush1.bf16.msra.mxu0 0
    %773 = vmatprep.subr.bf16.mxu0 0
    %774 = vmatpush1.bf16.msra.mxu0 0
    %775 = vmatprep.subr.bf16.mxu0 0
    %776 = vmatpush1.bf16.msra.mxu0 0
    %777 = vmatprep.subr.bf16.mxu0 0
    %778 = vmatpush1.bf16.msra.mxu0 0
    %779 = vmatprep.subr.bf16.mxu0 0
    %780 = vmatpush1.bf16.msra.mxu0 0
    %781 = vmatprep.subr.bf16.mxu0 0
    %782 = vmatpush1.bf16.msra.mxu0 0
    %783 = vmatprep.subr.bf16.mxu0 0
    %784 = vmatpush1.bf16.msra.mxu0 0
    %785 = vmatprep.subr.bf16.mxu0 0
    %786 = vmatpush1.bf16.msra.mxu0 0
    %787 = vmatprep.subr.bf16.mxu0 0
    %788 = vmatpush1.bf16.msra.mxu0 0
    %789 = vmatprep.subr.bf16.mxu0 0
    %790 = vmatpush1.bf16.msra.mxu0 0
    %791 = vmatprep.subr.bf16.mxu0 0
    %792 = vmatpush1.bf16.msra.mxu0 0
    %793 = vmatprep.subr.bf16.mxu0 0
    %794 = vmatpush1.bf16.msra.mxu0 0
    %795 = vmatprep.subr.bf16.mxu0 0
    %796 = vmatpush1.bf16.msra.mxu0 0
    %797 = vmatprep.subr.bf16.mxu0 0
    %798 = vmatpush1.bf16.msra.mxu0 0
    %799 = vmatprep.subr.bf16.mxu0 0
    %800 = vmatpush1.bf16.msra.mxu0 0
    %801 = vmatprep.mubr.bf16.mxu0 0
    %802 = vmatmul.mubr.bf16.gmra.mrb[0].mxu0 %v764
    %v803 = vpop.f32.mrb[0].mxu0
    %v804 = vadd.f32 0.0, %v803
    %v805 = vpop.f32.mrb[0].mxu0
    %v806 = vpop.f32.mrb[0].mxu0
    %v807 = vpop.f32.mrb[0].mxu0
    %808 = vdwg.mxu0
    %v809 = vadd.f32 %v755, %v804
    %v810 = vpack.c.bf16 %v594, %v594
    %s811 = scalar_lea.vmem %s5, 32
    %v812 = vld [vmem:[%s811] sm:$0xff]
    %v813 = vpack.c.bf16 %v812, %v812
    %v815 = vsel %vm608, %v813, 0
    %v818 = vsel %vm612, %v810, 0
    %820 = vmatprep.subr.bf16.mxu0 0
    %821 = vmatpush1.bf16.msra.mxu0 %v818
    %822 = vmatprep.subr.bf16.mxu0 0
    %823 = vmatpush1.bf16.msra.mxu0 0
    %824 = vmatprep.subr.bf16.mxu0 0
    %825 = vmatpush1.bf16.msra.mxu0 0
    %826 = vmatprep.subr.bf16.mxu0 0
    %827 = vmatpush1.bf16.msra.mxu0 0
    %828 = vmatprep.subr.bf16.mxu0 0
    %829 = vmatpush1.bf16.msra.mxu0 0
    %830 = vmatprep.subr.bf16.mxu0 0
    %831 = vmatpush1.bf16.msra.mxu0 0
    %832 = vmatprep.subr.bf16.mxu0 0
    %833 = vmatpush1.bf16.msra.mxu0 0
    %834 = vmatprep.subr.bf16.mxu0 0
    %835 = vmatpush1.bf16.msra.mxu0 0
    %836 = vmatprep.subr.bf16.mxu0 0
    %837 = vmatpush1.bf16.msra.mxu0 0
    %838 = vmatprep.subr.bf16.mxu0 0
    %839 = vmatpush1.bf16.msra.mxu0 0
    %840 = vmatprep.subr.bf16.mxu0 0
    %841 = vmatpush1.bf16.msra.mxu0 0
    %842 = vmatprep.subr.bf16.mxu0 0
    %843 = vmatpush1.bf16.msra.mxu0 0
    %844 = vmatprep.subr.bf16.mxu0 0
    %845 = vmatpush1.bf16.msra.mxu0 0
    %846 = vmatprep.subr.bf16.mxu0 0
    %847 = vmatpush1.bf16.msra.mxu0 0
    %848 = vmatprep.subr.bf16.mxu0 0
    %849 = vmatpush1.bf16.msra.mxu0 0
    %850 = vmatprep.subr.bf16.mxu0 0
    %851 = vmatpush1.bf16.msra.mxu0 0
    %852 = vmatprep.mubr.bf16.mxu0 0
    %853 = vmatmul.mubr.bf16.gmra.mrb[0].mxu0 %v815
    %v854 = vpop.f32.mrb[0].mxu0
    %v855 = vadd.f32 0.0, %v854
    %v856 = vpop.f32.mrb[0].mxu0
    %v857 = vpop.f32.mrb[0].mxu0
    %v858 = vpop.f32.mrb[0].mxu0
    %859 = vdwg.mxu0
    %v860 = vadd.f32 %v809, %v855
    %861 = vrot.lane.b32.xlu0 %v594, 127
    %v862 = vpop.permute.xlu0 %861
    %v863 = vsel %vm334, %v862, 0.0
    %v864 = vpack.c.bf16 %v863, %v863
    %s865 = scalar_lea.vmem %s5, 40
    %v866 = vld [vmem:[%s865] sm:$0xff]
    %v867 = vpack.c.bf16 %v866, %v866
    %v869 = vsel %vm608, %v867, 0
    %v872 = vsel %vm612, %v864, 0
    %874 = vmatprep.subr.bf16.mxu0 0
    %875 = vmatpush1.bf16.msra.mxu0 %v872
    %876 = vmatprep.subr.bf16.mxu0 0
    %877 = vmatpush1.bf16.msra.mxu0 0
    %878 = vmatprep.subr.bf16.mxu0 0
    %879 = vmatpush1.bf16.msra.mxu0 0
    %880 = vmatprep.subr.bf16.mxu0 0
    %881 = vmatpush1.bf16.msra.mxu0 0
    %882 = vmatprep.subr.bf16.mxu0 0
    %883 = vmatpush1.bf16.msra.mxu0 0
    %884 = vmatprep.subr.bf16.mxu0 0
    %885 = vmatpush1.bf16.msra.mxu0 0
    %886 = vmatprep.subr.bf16.mxu0 0
    %887 = vmatpush1.bf16.msra.mxu0 0
    %888 = vmatprep.subr.bf16.mxu0 0
    %889 = vmatpush1.bf16.msra.mxu0 0
    %890 = vmatprep.subr.bf16.mxu0 0
    %891 = vmatpush1.bf16.msra.mxu0 0
    %892 = vmatprep.subr.bf16.mxu0 0
    %893 = vmatpush1.bf16.msra.mxu0 0
    %894 = vmatprep.subr.bf16.mxu0 0
    %895 = vmatpush1.bf16.msra.mxu0 0
    %896 = vmatprep.subr.bf16.mxu0 0
    %897 = vmatpush1.bf16.msra.mxu0 0
    %898 = vmatprep.subr.bf16.mxu0 0
    %899 = vmatpush1.bf16.msra.mxu0 0
    %900 = vmatprep.subr.bf16.mxu0 0
    %901 = vmatpush1.bf16.msra.mxu0 0
    %902 = vmatprep.subr.bf16.mxu0 0
    %903 = vmatpush1.bf16.msra.mxu0 0
    %904 = vmatprep.subr.bf16.mxu0 0
    %905 = vmatpush1.bf16.msra.mxu0 0
    %906 = vmatprep.mubr.bf16.mxu0 0
    %907 = vmatmul.mubr.bf16.gmra.mrb[0].mxu0 %v869
    %v908 = vpop.f32.mrb[0].mxu0
    %v909 = vadd.f32 0.0, %v908
    %v910 = vpop.f32.mrb[0].mxu0
    %v911 = vpop.f32.mrb[0].mxu0
    %v912 = vpop.f32.mrb[0].mxu0
    %913 = vdwg.mxu0
    %v914 = vadd.f32 %v860, %v909
    %915 = vrot.lane.b32.xlu0 %v594, 121
    %v916 = vpop.permute.xlu0 %915
    %v917 = vsel %vm393, %v916, 0.0
    %v918 = vpack.c.bf16 %v917, %v917
    %s919 = scalar_lea.vmem %s5, 48
    %v920 = vld [vmem:[%s919] sm:$0xff]
    %v921 = vpack.c.bf16 %v920, %v920
    %v923 = vsel %vm608, %v921, 0
    %v926 = vsel %vm612, %v918, 0
    %928 = vmatprep.subr.bf16.mxu0 0
    %929 = vmatpush1.bf16.msra.mxu0 %v926
    %930 = vmatprep.subr.bf16.mxu0 0
    %931 = vmatpush1.bf16.msra.mxu0 0
    %932 = vmatprep.subr.bf16.mxu0 0
    %933 = vmatpush1.bf16.msra.mxu0 0
    %934 = vmatprep.subr.bf16.mxu0 0
    %935 = vmatpush1.bf16.msra.mxu0 0
    %936 = vmatprep.subr.bf16.mxu0 0
    %937 = vmatpush1.bf16.msra.mxu0 0
    %938 = vmatprep.subr.bf16.mxu0 0
    %939 = vmatpush1.bf16.msra.mxu0 0
    %940 = vmatprep.subr.bf16.mxu0 0
    %941 = vmatpush1.bf16.msra.mxu0 0
    %942 = vmatprep.subr.bf16.mxu0 0
    %943 = vmatpush1.bf16.msra.mxu0 0
    %944 = vmatprep.subr.bf16.mxu0 0
    %945 = vmatpush1.bf16.msra.mxu0 0
    %946 = vmatprep.subr.bf16.mxu0 0
    %947 = vmatpush1.bf16.msra.mxu0 0
    %948 = vmatprep.subr.bf16.mxu0 0
    %949 = vmatpush1.bf16.msra.mxu0 0
    %950 = vmatprep.subr.bf16.mxu0 0
    %951 = vmatpush1.bf16.msra.mxu0 0
    %952 = vmatprep.subr.bf16.mxu0 0
    %953 = vmatpush1.bf16.msra.mxu0 0
    %954 = vmatprep.subr.bf16.mxu0 0
    %955 = vmatpush1.bf16.msra.mxu0 0
    %956 = vmatprep.subr.bf16.mxu0 0
    %957 = vmatpush1.bf16.msra.mxu0 0
    %958 = vmatprep.subr.bf16.mxu0 0
    %959 = vmatpush1.bf16.msra.mxu0 0
    %960 = vmatprep.mubr.bf16.mxu0 0
    %961 = vmatmul.mubr.bf16.gmra.mrb[0].mxu0 %v923
    %v962 = vpop.f32.mrb[0].mxu0
    %v963 = vadd.f32 0.0, %v962
    %v964 = vpop.f32.mrb[0].mxu0
    %v965 = vpop.f32.mrb[0].mxu0
    %v966 = vpop.f32.mrb[0].mxu0
    %967 = vdwg.mxu0
    %v968 = vadd.f32 %v914, %v963
    %969 = vrot.lane.b32.xlu0 %v594, 120
    %v970 = vpop.permute.xlu0 %969
    %v971 = vsel %vm452, %v970, 0.0
    %v972 = vpack.c.bf16 %v971, %v971
    %s973 = scalar_lea.vmem %s5, 56
    %v974 = vld [vmem:[%s973] sm:$0xff]
    %v975 = vpack.c.bf16 %v974, %v974
    %v977 = vsel %vm608, %v975, 0
    %v980 = vsel %vm612, %v972, 0
    %982 = vmatprep.subr.bf16.mxu0 0
    %983 = vmatpush1.bf16.msra.mxu0 %v980
    %984 = vmatprep.subr.bf16.mxu0 0
    %985 = vmatpush1.bf16.msra.mxu0 0
    %986 = vmatprep.subr.bf16.mxu0 0
    %987 = vmatpush1.bf16.msra.mxu0 0
    %988 = vmatprep.subr.bf16.mxu0 0
    %989 = vmatpush1.bf16.msra.mxu0 0
    %990 = vmatprep.subr.bf16.mxu0 0
    %991 = vmatpush1.bf16.msra.mxu0 0
    %992 = vmatprep.subr.bf16.mxu0 0
    %993 = vmatpush1.bf16.msra.mxu0 0
    %994 = vmatprep.subr.bf16.mxu0 0
    %995 = vmatpush1.bf16.msra.mxu0 0
    %996 = vmatprep.subr.bf16.mxu0 0
    %997 = vmatpush1.bf16.msra.mxu0 0
    %998 = vmatprep.subr.bf16.mxu0 0
    %999 = vmatpush1.bf16.msra.mxu0 0
    %1000 = vmatprep.subr.bf16.mxu0 0
    %1001 = vmatpush1.bf16.msra.mxu0 0
    %1002 = vmatprep.subr.bf16.mxu0 0
    %1003 = vmatpush1.bf16.msra.mxu0 0
    %1004 = vmatprep.subr.bf16.mxu0 0
    %1005 = vmatpush1.bf16.msra.mxu0 0
    %1006 = vmatprep.subr.bf16.mxu0 0
    %1007 = vmatpush1.bf16.msra.mxu0 0
    %1008 = vmatprep.subr.bf16.mxu0 0
    %1009 = vmatpush1.bf16.msra.mxu0 0
    %1010 = vmatprep.subr.bf16.mxu0 0
    %1011 = vmatpush1.bf16.msra.mxu0 0
    %1012 = vmatprep.subr.bf16.mxu0 0
    %1013 = vmatpush1.bf16.msra.mxu0 0
    %1014 = vmatprep.mubr.bf16.mxu0 0
    %1015 = vmatmul.mubr.bf16.gmra.mrb[0].mxu0 %v977
    %v1016 = vpop.f32.mrb[0].mxu0
    %v1017 = vadd.f32 0.0, %v1016
    %v1018 = vpop.f32.mrb[0].mxu0
    %v1019 = vpop.f32.mrb[0].mxu0
    %v1020 = vpop.f32.mrb[0].mxu0
    %1021 = vdwg.mxu0
    %v1022 = vadd.f32 %v968, %v1017
    %1023 = vrot.lane.b32.xlu0 %v594, 119
    %v1024 = vpop.permute.xlu0 %1023
    %v1025 = vsel %vm513, %v1024, 0.0
    %v1026 = vpack.c.bf16 %v1025, %v1025
    %s1027 = scalar_lea.vmem %s5, 64
    %v1028 = vld [vmem:[%s1027] sm:$0xff]
    %v1029 = vpack.c.bf16 %v1028, %v1028
    %v1031 = vsel %vm608, %v1029, 0
    %v1034 = vsel %vm612, %v1026, 0
    %1036 = vmatprep.subr.bf16.mxu0 0
    %1037 = vmatpush1.bf16.msra.mxu0 %v1034
    %1038 = vmatprep.subr.bf16.mxu0 0
    %1039 = vmatpush1.bf16.msra.mxu0 0
    %1040 = vmatprep.subr.bf16.mxu0 0
    %1041 = vmatpush1.bf16.msra.mxu0 0
    %1042 = vmatprep.subr.bf16.mxu0 0
    %1043 = vmatpush1.bf16.msra.mxu0 0
    %1044 = vmatprep.subr.bf16.mxu0 0
    %1045 = vmatpush1.bf16.msra.mxu0 0
    %1046 = vmatprep.subr.bf16.mxu0 0
    %1047 = vmatpush1.bf16.msra.mxu0 0
    %1048 = vmatprep.subr.bf16.mxu0 0
    %1049 = vmatpush1.bf16.msra.mxu0 0
    %1050 = vmatprep.subr.bf16.mxu0 0
    %1051 = vmatpush1.bf16.msra.mxu0 0
    %1052 = vmatprep.subr.bf16.mxu0 0
    %1053 = vmatpush1.bf16.msra.mxu0 0
    %1054 = vmatprep.subr.bf16.mxu0 0
    %1055 = vmatpush1.bf16.msra.mxu0 0
    %1056 = vmatprep.subr.bf16.mxu0 0
    %1057 = vmatpush1.bf16.msra.mxu0 0
    %1058 = vmatprep.subr.bf16.mxu0 0
    %1059 = vmatpush1.bf16.msra.mxu0 0
    %1060 = vmatprep.subr.bf16.mxu0 0
    %1061 = vmatpush1.bf16.msra.mxu0 0
    %1062 = vmatprep.subr.bf16.mxu0 0
    %1063 = vmatpush1.bf16.msra.mxu0 0
    %1064 = vmatprep.subr.bf16.mxu0 0
    %1065 = vmatpush1.bf16.msra.mxu0 0
    %1066 = vmatprep.subr.bf16.mxu0 0
    %1067 = vmatpush1.bf16.msra.mxu0 0
    %1068 = vmatprep.mubr.bf16.mxu0 0
    %1069 = vmatmul.mubr.bf16.gmra.mrb[0].mxu0 %v1031
    %v1070 = vpop.f32.mrb[0].mxu0
    %v1071 = vadd.f32 0.0, %v1070
    %v1072 = vpop.f32.mrb[0].mxu0
    %v1073 = vpop.f32.mrb[0].mxu0
    %v1074 = vpop.f32.mrb[0].mxu0
    %1075 = vdwg.mxu0
    %v1076 = vadd.f32 %v1022, %v1071
    %v1077 = vsel %vm275, %v1076, 0.0
    %1078 = vadd.xlane.f32.xlu0 %v1077
    %v1079 = vpop.xlane.xlu0 %1078
    %v1080 = vmul.f32 %v1079, 0.0078125
    %v1081 = vsub.f32 %v1076, %v1080
    %v1082 = vsel %vm275, %v1081, 0.0
    %v1083 = vmul.f32 %v1082, %v1082
    %1084 = vadd.xlane.f32.xlu0 %v1083
    %v1085 = vpop.xlane.xlu0 %1084
    %v1086 = vmul.f32 %v1085, 0.0078125
    %v1087 = vadd.f32 %v1086, 1e-05
    %v1088 = vrsqrt.pop %v1087
    %v1089 = vmul.f32 %v1081, %v1088
    %v1090 = vld [vmem:[%s6] sm:$0xff]
    %1092 = vset.pattern.permute.xlu0 0
    %1093 = vperm.xlu0 %1092, %v1090
    %v1094 = vpop.permute.xlu0 %1093
    %v1096 = vmul.f32 %v1089, %v1094
    %v1097 = vld [vmem:[%s7] sm:$0xff]
    %1099 = vset.pattern.permute.xlu0 0
    %1100 = vperm.xlu0 %1099, %v1097
    %v1101 = vpop.permute.xlu0 %1100
    %v1103 = vadd.f32 %v1096, %v1101
    %v1104 = vmax.f32 %v1103, 0.0
    %v1105 = vsel %vm275, %v1104, 0.0
    %1106 = vst [vmem:[#allocation2] sm:$0xff] %v1105
    // Predicated region
    $region34: #{tpu_custom_call.1} parent=1 // pred_check
      _
    $region35: #{tpu_custom_call.1} parent=1 // pred_check_branch
      %1108 = sbr.rel (0) target = $region37
    $region36: #{tpu_custom_call.1} parent=1 // pred_region
      %s1110 = ssub.s32 128, 128
      %1111 = vsyncadd [#allocation3], %s1110
      %s1113 = sshll.u32 [#allocation2], 4
      %s1114 = int_to_ptr.vmem [resolvable:$true] %s1113
      %1116 = dma.vmem_to_hbm [thread:$0]  %s1114, 128, %s8, [#allocation3]
    $region37: #{tpu_custom_call.1} parent=1 // pred_fallthru
      _
    // Predicated region
    $region38: #{tpu_custom_call.1} parent=1 // pred_check
      _
    $region39: #{tpu_custom_call.1} parent=1 // pred_check_branch
      %1118 = sbr.rel (0) target = $region41
    $region40: #{tpu_custom_call.1} parent=1 // pred_region
      %1119 = dma.done [#allocation3], 128
    $region41: #{tpu_custom_call.1} parent=1 // pred_fallthru
      _
    %1120 = vsyncpa [#allocation3], 1

</llo_original>
